<compile_context>
chip_gen: v7x
topology: tpu7x:2x2x1
jax: 0.10.0
libtpu: 0.0.40
codegen_flags: <defaults>
</compile_context>

<pallas_src>
import functools
import math

import jax
import jax.numpy as jnp
from jax.experimental import pallas as pl
from jax.experimental.pallas import tpu as pltpu


# ----------------------------------------------------------------------------
# Host-side constants: Gaussian taps (Python floats) + padded band matrix.
# ----------------------------------------------------------------------------
def _gaussian_taps(win_size, sigma):
    half = (win_size - 1) / 2.0
    vals = [math.exp(-((i - half) ** 2) / (2.0 * sigma * sigma)) for i in range(win_size)]
    s = sum(vals)
    return tuple(v / s for v in vals)


def _band_matrix(n_out, n_in, taps):
    """(n_out, n_in) M with (M @ v)[o] = sum_k taps[k] * v[o + k] (valid conv)."""
    m = [[0.0] * n_in for _ in range(n_out)]
    for o in range(n_out):
        for k, t in enumerate(taps):
            m[o][o + k] = t
    return jnp.asarray(m, dtype=jnp.float32)


def _band_matrix_T_padded(n_in, n_out, n_out_pad, taps):
    """(n_in, n_out_pad) M with (Z @ M)[:, o] = sum_k taps[k] * Z[:, o + k];
    columns o >= n_out are zero padding (lane alignment)."""
    m = [[0.0] * n_out_pad for _ in range(n_in)]
    for o in range(n_out):
        for k, t in enumerate(taps):
            m[o + k][o] = t
    return jnp.asarray(m, dtype=jnp.float32)


def _round_up(x, m):
    return ((x + m - 1) // m) * m


def _pick_bt(B, per_elem_bytes, target_bytes=1 << 20):
    """Batch elements per grid step: ~1 MiB input block, but keep >=2 steps."""
    bt = max(1, min(B, target_bytes // max(per_elem_bytes, 1)))
    if B >= 2:
        bt = min(bt, B // 2)          # >=2 grid steps -> both v7x TensorCores busy
    bt = max(bt, 1)
    while B % bt:                      # simple scheme: Bt must divide B
        bt -= 1
    return bt


# ----------------------------------------------------------------------------
# Pallas kernel: per-step partial sums of all three loss components.
#   x_ref, y_ref : (Bt, C, H, W) native dtype
#   ght_ref      : (W, Wout_p)   f32  horizontal Gaussian band matrix (padded)
#   o_ref        : (1, 8, 128)   f32  row0=sum((x-y)^2), row1=sum ||x-y||_C,
#                                     row2=sum(ssim_map over valid region)
# ----------------------------------------------------------------------------
def _combined_loss_kernel(x_ref, y_ref, ght_ref, o_ref, *,
                          bt, C, H, W, hout, wout, wout_p, taps, c1, c2):
    x = x_ref[...].astype(jnp.float32)          # (bt, C, H, W), cast in-kernel
    y = y_ref[...].astype(jnp.float32)

    diff = x - y
    sq = diff * diff
    csum = sq[:, 0]                             # per-pixel sum over channels
    for c in range(1, C):
        csum = csum + sq[:, c]                  # (bt, H, W)
    mse_part = jnp.sum(csum)
    vec_part = jnp.sum(jnp.sqrt(csum))

    n_maps = bt * C
    rows = n_maps * H

    def flat(a):                                # (bt,C,H,W) -> (bt*C*H, W), trivial
        return a.reshape(rows, W)

    # 5 pre-filter maps row-stacked -> ONE big MXU matmul for the horizontal pass.
    p = jnp.concatenate(
        [flat(x), flat(y), flat(x * x), flat(y * y), flat(x * y)], axis=0)   # (5*rows, W)
    ph = jnp.dot(p, ght_ref[...], preferred_element_type=jnp.float32)        # (5*rows, wout_p)
    ph = ph.reshape(5 * n_maps, H, wout_p)

    # Vertical Gaussian filter: 11 static shifted-slice MACs on the VPU.
    pv = taps[0] * ph[:, 0:hout, :]
    for k in range(1, len(taps)):
        pv = pv + taps[k] * ph[:, k:k + hout, :]                             # (5*n_maps, hout, wout_p)

    mu1 = pv[0 * n_maps:1 * n_maps]
    mu2 = pv[1 * n_maps:2 * n_maps]
    exx = pv[2 * n_maps:3 * n_maps]
    eyy = pv[3 * n_maps:4 * n_maps]
    exy = pv[4 * n_maps:5 * n_maps]

    mu1_sq = mu1 * mu1
    mu2_sq = mu2 * mu2
    mu12 = mu1 * mu2
    s1 = exx - mu1_sq
    s2 = eyy - mu2_sq
    s12 = exy - mu12

    num = (2.0 * mu12 + c1) * (2.0 * s12 + c2)
    den = (mu1_sq + mu2_sq + c1) * (s1 + s2 + c2)
    ssim_map = num * pl.reciprocal(den, approx=True)       # EUP, not VALU divide

    # Padded lanes have zero stats -> ssim == 1 there; must mask before summing.
    if wout_p != wout:
        lane = jax.lax.broadcasted_iota(jnp.int32, ssim_map.shape, 2)
        ssim_map = jnp.where(lane < wout, ssim_map, 0.0)
    ssim_part = jnp.sum(ssim_map)

    # Lane-dense (8, 128) output block: row k holds partial k broadcast over lanes.
    row_id = jax.lax.broadcasted_iota(jnp.int32, (8, 128), 0)
    blk = jnp.where(row_id == 0, mse_part,
          jnp.where(row_id == 1, vec_part,
          jnp.where(row_id == 2, ssim_part, 0.0)))
    o_ref[0] = blk


# ----------------------------------------------------------------------------
# Public wrapper: CombinedMSEVALSSIMLoss.forward(output, target)
# ----------------------------------------------------------------------------
def combined_mse_val_ssim_loss(output, target, alpha=0.45, beta=0.45, gamma=0.1,
                               data_range=1.0, win_size=11, win_sigma=1.5,
                               k1=0.01, k2=0.03):
    assert output.shape == target.shape and output.ndim == 4
    B, C, H, W = output.shape
    assert H >= win_size and W >= win_size, "image smaller than SSIM window"

    hout = H - win_size + 1
    wout = W - win_size + 1
    wout_p = _round_up(wout, 128)               # lane alignment, same tile count

    taps = _gaussian_taps(win_size, win_sigma)
    ght_p = _band_matrix_T_padded(W, wout, wout_p, taps)   # (W, wout_p) f32 constant

    c1 = float((k1 * data_range) ** 2)
    c2 = float((k2 * data_range) ** 2)

    itemsize = jnp.dtype(output.dtype).itemsize
    Bt = _pick_bt(B, C * H * W * itemsize)
    steps = B // Bt

    # VMEM budget (double-buffered inputs + f32 intermediates inside the body).
    in_block = Bt * C * H * W * itemsize
    f32_block = Bt * C * H * W * 4
    filt_block = 5 * Bt * C * H * wout_p * 4
    vmem_est = (2 * 2 * in_block + 2 * W * wout_p * 4 + 2 * 8 * 128 * 4
                + 12 * f32_block + 3 * filt_block)
    vmem_limit = int(min(max(vmem_est, 32 << 20), 64 << 20))
    # TODO(synk): if vmem_est > 64 MiB (v7x physical VMEM), tile spatially over H
    #             with a (win_size - 1)-row halo instead of whole-image blocks.

    flops = (8 * B * C * H * W
             + 2 * (5 * B * C * H) * W * wout_p
             + 2 * win_size * 5 * B * C * hout * wout_p
             + 30 * B * C * hout * wout_p)
    cost = pl.CostEstimate(
        flops=flops,
        transcendentals=B * H * W + B * C * hout * wout_p,
        bytes_accessed=2 * output.size * itemsize + W * wout_p * 4 + steps * 8 * 128 * 4)

    kernel = functools.partial(_combined_loss_kernel, bt=Bt, C=C, H=H, W=W,
                               hout=hout, wout=wout, wout_p=wout_p,
                               taps=taps, c1=c1, c2=c2)

    parts = pl.pallas_call(
        kernel,
        out_shape=jax.ShapeDtypeStruct((steps, 8, 128), jnp.float32),
        grid_spec=pltpu.PrefetchScalarGridSpec(
            num_scalar_prefetch=0,
            grid=(steps,),
            in_specs=[
                pl.BlockSpec((Bt, C, H, W), lambda b: (b, 0, 0, 0)),
                pl.BlockSpec((Bt, C, H, W), lambda b: (b, 0, 0, 0)),
                pl.BlockSpec((W, wout_p), lambda b: (0, 0)),
            ],
            out_specs=pl.BlockSpec((1, 8, 128), lambda b: (b, 0, 0)),
        ),
        compiler_params=pltpu.CompilerParams(
            dimension_semantics=("parallel",),
            vmem_limit_bytes=vmem_limit),
        cost_estimate=cost,
    )(output, target, ght_p)

    mse_sum = jnp.sum(parts[:, 0, 0])
    vec_sum = jnp.sum(parts[:, 1, 0])
    ssim_sum = jnp.sum(parts[:, 2, 0])

    mse = mse_sum / (B * C * H * W)                               # nn.MSELoss()
    vec = vec_sum / (B * H * W) / jnp.sqrt(jnp.float32(C))        # vector_accuracy_loss
    ssim_val = ssim_sum / (B * C * hout * wout)                   # ssim(..., data_range)
    return alpha * mse + beta * vec + gamma * (1.0 - ssim_val)


# ----------------------------------------------------------------------------
# Pure-JAX reference (same math, no Pallas) for an in-script correctness gate.
# ----------------------------------------------------------------------------
def _reference_loss(output, target, alpha=0.45, beta=0.45, gamma=0.1,
                    data_range=1.0, win_size=11, win_sigma=1.5,
                    k1=0.01, k2=0.03):
    output = output.astype(jnp.float32)
    target = target.astype(jnp.float32)
    B, C, H, W = output.shape
    mse = jnp.mean((output - target) ** 2)
    d = output - target
    dist = jnp.sqrt(jnp.sum(d * d, axis=1))                       # (B, H, W)
    vec = jnp.mean(dist) / jnp.sqrt(jnp.float32(C))

    hout = H - win_size + 1
    wout = W - win_size + 1
    taps = _gaussian_taps(win_size, win_sigma)
    gv = _band_matrix(hout, H, taps)
    gh = _band_matrix(wout, W, taps)

    def filt(z):                                                  # (B,C,H,W)->(B,C,hout,wout)
        return jnp.einsum('oh,bchw,lw->bcol', gv, z, gh)

    c1 = (k1 * data_range) ** 2
    c2 = (k2 * data_range) ** 2
    mu1 = filt(output)
    mu2 = filt(target)
    s1 = filt(output * output) - mu1 * mu1
    s2 = filt(target * target) - mu2 * mu2
    s12 = filt(output * target) - mu1 * mu2
    cs = (2.0 * s12 + c2) / (s1 + s2 + c2)
    ssim_map = ((2.0 * mu1 * mu2 + c1) / (mu1 * mu1 + mu2 * mu2 + c1)) * cs
    return alpha * mse + beta * vec + gamma * (1.0 - jnp.mean(ssim_map))


if __name__ == "__main__":
    # Small but valid configuration (SSIM needs H, W >= 11): B=2, C=3, 32x32.
    B, C, H, W = 2, 3, 32, 32
    key = jax.random.PRNGKey(0)
    ko, kt = jax.random.split(key)
    output = jax.random.uniform(ko, (B, C, H, W), jnp.float32)    # "images" in [0,1]
    target = jax.random.uniform(kt, (B, C, H, W), jnp.float32)

    loss = jax.block_until_ready(combined_mse_val_ssim_loss(output, target))
    ref = jax.block_until_ready(_reference_loss(output, target))

    assert loss.shape == (), loss.shape
    assert bool(jnp.isfinite(loss))
    assert bool(jnp.allclose(loss, ref, rtol=5e-3, atol=5e-4)), (float(loss), float(ref))
    print("KERNEL_OK")
</pallas_src>

<mosaic_0001>
module attributes {stable_mosaic.version = 11 : i64} {
  func.func @_combined_loss_kernel(%arg0: i32, %arg1: memref<1x3x32x32xf32, #tpu.memory_space<vmem>>, %arg2: memref<1x3x32x32xf32, #tpu.memory_space<vmem>>, %arg3: memref<32x128xf32, #tpu.memory_space<vmem>>, %arg4: memref<1x8x128xf32, #tpu.memory_space<vmem>>) attributes {dimension_semantics = [#tpu.dimension_semantics<parallel>], iteration_bounds = array<i64: 2>, scalar_prefetch = 0 : i64, scratch_operands = 0 : i64, tpu.core_type = #tpu.core_type<tc>, window_params = [{transform_indices = @transform_0, window_bounds = array<i64: 1, 3, 32, 32>}, {transform_indices = @transform_1, window_bounds = array<i64: 1, 3, 32, 32>}, {pipeline_mode = #tpu.pipeline_mode<synchronous>, transform_indices = @transform_2, window_bounds = array<i64: 32, 128>}, {transform_indices = @transform_3, window_bounds = array<i64: 1, 8, 128>}]} {
    %c0 = arith.constant 0 : index
    %c0_0 = arith.constant 0 : index
    %c0_1 = arith.constant 0 : index
    %c0_2 = arith.constant 0 : index
    %0 = vector.load %arg1[%c0, %c0_0, %c0_1, %c0_2] : memref<1x3x32x32xf32, #tpu.memory_space<vmem>>, vector<1x3x32x32xf32>
    %c0_3 = arith.constant 0 : index
    %c0_4 = arith.constant 0 : index
    %c0_5 = arith.constant 0 : index
    %c0_6 = arith.constant 0 : index
    %1 = vector.load %arg2[%c0_3, %c0_4, %c0_5, %c0_6] : memref<1x3x32x32xf32, #tpu.memory_space<vmem>>, vector<1x3x32x32xf32>
    %2 = arith.subf %0, %1 : vector<1x3x32x32xf32>
    %3 = arith.mulf %2, %2 : vector<1x3x32x32xf32>
    %4 = vector.extract_strided_slice %3 {offsets = [0, 0, 0, 0], sizes = [1, 1, 32, 32], strides = [1, 1, 1, 1]} : vector<1x3x32x32xf32> to vector<1x1x32x32xf32>
    %5 = vector.shape_cast %4 : vector<1x1x32x32xf32> to vector<1x32x32xf32>
    %6 = vector.extract_strided_slice %3 {offsets = [0, 1, 0, 0], sizes = [1, 1, 32, 32], strides = [1, 1, 1, 1]} : vector<1x3x32x32xf32> to vector<1x1x32x32xf32>
    %7 = vector.shape_cast %6 : vector<1x1x32x32xf32> to vector<1x32x32xf32>
    %8 = arith.addf %5, %7 : vector<1x32x32xf32>
    %9 = vector.extract_strided_slice %3 {offsets = [0, 2, 0, 0], sizes = [1, 1, 32, 32], strides = [1, 1, 1, 1]} : vector<1x3x32x32xf32> to vector<1x1x32x32xf32>
    %10 = vector.shape_cast %9 : vector<1x1x32x32xf32> to vector<1x32x32xf32>
    %11 = arith.addf %8, %10 : vector<1x32x32xf32>
    %12 = vector.shape_cast %11 : vector<1x32x32xf32> to vector<1x1x32x32xf32>
    %cst = arith.constant dense<0.000000e+00> : vector<1xf32>
    %13 = vector.multi_reduction <add>, %12, %cst [1, 2, 3] : vector<1x1x32x32xf32> to vector<1xf32>
    %14 = vector.shape_cast %13 : vector<1xf32> to vector<1x1x1x1xf32>
    %15 = vector.extract %14[0, 0, 0, 0] : f32 from vector<1x1x1x1xf32>
    %16 = math.sqrt %11 : vector<1x32x32xf32>
    %17 = vector.shape_cast %16 : vector<1x32x32xf32> to vector<1x1x32x32xf32>
    %cst_7 = arith.constant dense<0.000000e+00> : vector<1xf32>
    %18 = vector.multi_reduction <add>, %17, %cst_7 [1, 2, 3] : vector<1x1x32x32xf32> to vector<1xf32>
    %19 = vector.shape_cast %18 : vector<1xf32> to vector<1x1x1x1xf32>
    %20 = vector.extract %19[0, 0, 0, 0] : f32 from vector<1x1x1x1xf32>
    %21 = vector.shape_cast %0 : vector<1x3x32x32xf32> to vector<96x32xf32>
    %22 = vector.shape_cast %1 : vector<1x3x32x32xf32> to vector<96x32xf32>
    %23 = arith.mulf %0, %0 : vector<1x3x32x32xf32>
    %24 = vector.shape_cast %23 : vector<1x3x32x32xf32> to vector<96x32xf32>
    %25 = arith.mulf %1, %1 : vector<1x3x32x32xf32>
    %26 = vector.shape_cast %25 : vector<1x3x32x32xf32> to vector<96x32xf32>
    %27 = arith.mulf %0, %1 : vector<1x3x32x32xf32>
    %28 = vector.shape_cast %27 : vector<1x3x32x32xf32> to vector<96x32xf32>
    %29 = tpu.concatenate %21, %22, %24, %26, %28 in 0 : vector<96x32xf32>, vector<96x32xf32>, vector<96x32xf32>, vector<96x32xf32>, vector<96x32xf32> -> vector<480x32xf32>
    %c0_8 = arith.constant 0 : index
    %c0_9 = arith.constant 0 : index
    %30 = vector.load %arg3[%c0_8, %c0_9] : memref<32x128xf32, #tpu.memory_space<vmem>>, vector<32x128xf32>
    %cst_10 = arith.constant dense<0.000000e+00> : vector<480x128xf32>
    %31 = tpu.matmul %29, %30, %cst_10 {dimension_numbers = #tpu.dot_dimension_numbers<[1], [0], [0], [1], [0, 0, 1, 1], [], []>} : vector<480x32xf32>, vector<32x128xf32>, vector<480x128xf32> -> vector<480x128xf32>
    %32 = vector.shape_cast %31 : vector<480x128xf32> to vector<15x32x128xf32>
    %33 = vector.extract_strided_slice %32 {offsets = [0, 0, 0], sizes = [15, 22, 128], strides = [1, 1, 1]} : vector<15x32x128xf32> to vector<15x22x128xf32>
    %cst_11 = arith.constant 0.00102838012 : f32
    %34 = vector.broadcast %cst_11 : f32 to vector<15x22x128xf32>
    %35 = arith.mulf %34, %33 : vector<15x22x128xf32>
    %36 = vector.extract_strided_slice %32 {offsets = [0, 1, 0], sizes = [15, 22, 128], strides = [1, 1, 1]} : vector<15x32x128xf32> to vector<15x22x128xf32>
    %cst_12 = arith.constant 0.00759875821 : f32
    %37 = vector.broadcast %cst_12 : f32 to vector<15x22x128xf32>
    %38 = arith.mulf %37, %36 : vector<15x22x128xf32>
    %39 = arith.addf %35, %38 : vector<15x22x128xf32>
    %40 = vector.extract_strided_slice %32 {offsets = [0, 2, 0], sizes = [15, 22, 128], strides = [1, 1, 1]} : vector<15x32x128xf32> to vector<15x22x128xf32>
    %cst_13 = arith.constant 0.0360007733 : f32
    %41 = vector.broadcast %cst_13 : f32 to vector<15x22x128xf32>
    %42 = arith.mulf %41, %40 : vector<15x22x128xf32>
    %43 = arith.addf %39, %42 : vector<15x22x128xf32>
    %44 = vector.extract_strided_slice %32 {offsets = [0, 3, 0], sizes = [15, 22, 128], strides = [1, 1, 1]} : vector<15x32x128xf32> to vector<15x22x128xf32>
    %cst_14 = arith.constant 0.109360687 : f32
    %45 = vector.broadcast %cst_14 : f32 to vector<15x22x128xf32>
    %46 = arith.mulf %45, %44 : vector<15x22x128xf32>
    %47 = arith.addf %43, %46 : vector<15x22x128xf32>
    %48 = vector.extract_strided_slice %32 {offsets = [0, 4, 0], sizes = [15, 22, 128], strides = [1, 1, 1]} : vector<15x32x128xf32> to vector<15x22x128xf32>
    %cst_15 = arith.constant 0.213005543 : f32
    %49 = vector.broadcast %cst_15 : f32 to vector<15x22x128xf32>
    %50 = arith.mulf %49, %48 : vector<15x22x128xf32>
    %51 = arith.addf %47, %50 : vector<15x22x128xf32>
    %52 = vector.extract_strided_slice %32 {offsets = [0, 5, 0], sizes = [15, 22, 128], strides = [1, 1, 1]} : vector<15x32x128xf32> to vector<15x22x128xf32>
    %cst_16 = arith.constant 0.266011715 : f32
    %53 = vector.broadcast %cst_16 : f32 to vector<15x22x128xf32>
    %54 = arith.mulf %53, %52 : vector<15x22x128xf32>
    %55 = arith.addf %51, %54 : vector<15x22x128xf32>
    %56 = vector.extract_strided_slice %32 {offsets = [0, 6, 0], sizes = [15, 22, 128], strides = [1, 1, 1]} : vector<15x32x128xf32> to vector<15x22x128xf32>
    %cst_17 = arith.constant 0.213005543 : f32
    %57 = vector.broadcast %cst_17 : f32 to vector<15x22x128xf32>
    %58 = arith.mulf %57, %56 : vector<15x22x128xf32>
    %59 = arith.addf %55, %58 : vector<15x22x128xf32>
    %60 = vector.extract_strided_slice %32 {offsets = [0, 7, 0], sizes = [15, 22, 128], strides = [1, 1, 1]} : vector<15x32x128xf32> to vector<15x22x128xf32>
    %cst_18 = arith.constant 0.109360687 : f32
    %61 = vector.broadcast %cst_18 : f32 to vector<15x22x128xf32>
    %62 = arith.mulf %61, %60 : vector<15x22x128xf32>
    %63 = arith.addf %59, %62 : vector<15x22x128xf32>
    %64 = vector.extract_strided_slice %32 {offsets = [0, 8, 0], sizes = [15, 22, 128], strides = [1, 1, 1]} : vector<15x32x128xf32> to vector<15x22x128xf32>
    %cst_19 = arith.constant 0.0360007733 : f32
    %65 = vector.broadcast %cst_19 : f32 to vector<15x22x128xf32>
    %66 = arith.mulf %65, %64 : vector<15x22x128xf32>
    %67 = arith.addf %63, %66 : vector<15x22x128xf32>
    %68 = vector.extract_strided_slice %32 {offsets = [0, 9, 0], sizes = [15, 22, 128], strides = [1, 1, 1]} : vector<15x32x128xf32> to vector<15x22x128xf32>
    %cst_20 = arith.constant 0.00759875821 : f32
    %69 = vector.broadcast %cst_20 : f32 to vector<15x22x128xf32>
    %70 = arith.mulf %69, %68 : vector<15x22x128xf32>
    %71 = arith.addf %67, %70 : vector<15x22x128xf32>
    %72 = vector.extract_strided_slice %32 {offsets = [0, 10, 0], sizes = [15, 22, 128], strides = [1, 1, 1]} : vector<15x32x128xf32> to vector<15x22x128xf32>
    %cst_21 = arith.constant 0.00102838012 : f32
    %73 = vector.broadcast %cst_21 : f32 to vector<15x22x128xf32>
    %74 = arith.mulf %73, %72 : vector<15x22x128xf32>
    %75 = arith.addf %71, %74 : vector<15x22x128xf32>
    %76 = vector.extract_strided_slice %75 {offsets = [0, 0, 0], sizes = [3, 22, 128], strides = [1, 1, 1]} : vector<15x22x128xf32> to vector<3x22x128xf32>
    %77 = vector.extract_strided_slice %75 {offsets = [3, 0, 0], sizes = [3, 22, 128], strides = [1, 1, 1]} : vector<15x22x128xf32> to vector<3x22x128xf32>
    %78 = vector.extract_strided_slice %75 {offsets = [6, 0, 0], sizes = [3, 22, 128], strides = [1, 1, 1]} : vector<15x22x128xf32> to vector<3x22x128xf32>
    %79 = vector.extract_strided_slice %75 {offsets = [9, 0, 0], sizes = [3, 22, 128], strides = [1, 1, 1]} : vector<15x22x128xf32> to vector<3x22x128xf32>
    %80 = vector.extract_strided_slice %75 {offsets = [12, 0, 0], sizes = [3, 22, 128], strides = [1, 1, 1]} : vector<15x22x128xf32> to vector<3x22x128xf32>
    %81 = arith.mulf %76, %76 : vector<3x22x128xf32>
    %82 = arith.mulf %77, %77 : vector<3x22x128xf32>
    %83 = arith.mulf %76, %77 : vector<3x22x128xf32>
    %84 = arith.subf %78, %81 : vector<3x22x128xf32>
    %85 = arith.subf %79, %82 : vector<3x22x128xf32>
    %86 = arith.subf %80, %83 : vector<3x22x128xf32>
    %cst_22 = arith.constant 2.000000e+00 : f32
    %87 = vector.broadcast %cst_22 : f32 to vector<3x22x128xf32>
    %88 = arith.mulf %87, %83 : vector<3x22x128xf32>
    %cst_23 = arith.constant 9.99999974E-5 : f32
    %89 = vector.broadcast %cst_23 : f32 to vector<3x22x128xf32>
    %90 = arith.addf %88, %89 : vector<3x22x128xf32>
    %cst_24 = arith.constant 2.000000e+00 : f32
    %91 = vector.broadcast %cst_24 : f32 to vector<3x22x128xf32>
    %92 = arith.mulf %91, %86 : vector<3x22x128xf32>
    %cst_25 = arith.constant 8.99999984E-4 : f32
    %93 = vector.broadcast %cst_25 : f32 to vector<3x22x128xf32>
    %94 = arith.addf %92, %93 : vector<3x22x128xf32>
    %95 = arith.mulf %90, %94 : vector<3x22x128xf32>
    %96 = arith.addf %81, %82 : vector<3x22x128xf32>
    %cst_26 = arith.constant 9.99999974E-5 : f32
    %97 = vector.broadcast %cst_26 : f32 to vector<3x22x128xf32>
    %98 = arith.addf %96, %97 : vector<3x22x128xf32>
    %99 = arith.addf %84, %85 : vector<3x22x128xf32>
    %cst_27 = arith.constant 8.99999984E-4 : f32
    %100 = vector.broadcast %cst_27 : f32 to vector<3x22x128xf32>
    %101 = arith.addf %99, %100 : vector<3x22x128xf32>
    %102 = arith.mulf %98, %101 : vector<3x22x128xf32>
    %103 = tpu.reciprocal %102 {approx = true} : vector<3x22x128xf32> -> vector<3x22x128xf32>
    %104 = arith.mulf %95, %103 : vector<3x22x128xf32>
    %105 = tpu.iota {dimensions = array<i32: 2>} : vector<3x22x128xi32>
    %c22_i32 = arith.constant 22 : i32
    %106 = vector.broadcast %c22_i32 : i32 to vector<3x22x128xi32>
    %107 = arith.cmpi slt, %105, %106 : vector<3x22x128xi32>
    %cst_28 = arith.constant 0.000000e+00 : f32
    %108 = vector.broadcast %cst_28 : f32 to vector<3x22x128xf32>
    %109 = arith.select %107, %104, %108 : vector<3x22x128xi1>, vector<3x22x128xf32>
    %110 = vector.shape_cast %109 : vector<3x22x128xf32> to vector<1x3x22x128xf32>
    %cst_29 = arith.constant dense<0.000000e+00> : vector<1xf32>
    %111 = vector.multi_reduction <add>, %110, %cst_29 [1, 2, 3] : vector<1x3x22x128xf32> to vector<1xf32>
    %112 = vector.shape_cast %111 : vector<1xf32> to vector<1x1x1x1xf32>
    %113 = vector.extract %112[0, 0, 0, 0] : f32 from vector<1x1x1x1xf32>
    %114 = tpu.iota {dimensions = array<i32: 0>} : vector<8x128xi32>
    %c0_i32 = arith.constant 0 : i32
    %115 = vector.broadcast %c0_i32 : i32 to vector<8x128xi32>
    %116 = arith.cmpi eq, %114, %115 : vector<8x128xi32>
    %c1_i32 = arith.constant 1 : i32
    %117 = vector.broadcast %c1_i32 : i32 to vector<8x128xi32>
    %118 = arith.cmpi eq, %114, %117 : vector<8x128xi32>
    %c2_i32 = arith.constant 2 : i32
    %119 = vector.broadcast %c2_i32 : i32 to vector<8x128xi32>
    %120 = arith.cmpi eq, %114, %119 : vector<8x128xi32>
    %cst_30 = arith.constant 0.000000e+00 : f32
    %121 = vector.broadcast %113 : f32 to vector<8x128xf32>
    %122 = vector.broadcast %cst_30 : f32 to vector<8x128xf32>
    %123 = arith.select %120, %121, %122 : vector<8x128xi1>, vector<8x128xf32>
    %124 = vector.broadcast %20 : f32 to vector<8x128xf32>
    %125 = arith.select %118, %124, %123 : vector<8x128xi1>, vector<8x128xf32>
    %126 = vector.broadcast %15 : f32 to vector<8x128xf32>
    %127 = arith.select %116, %126, %125 : vector<8x128xi1>, vector<8x128xf32>
    %c0_31 = arith.constant 0 : index
    %c0_32 = arith.constant 0 : index
    %c0_33 = arith.constant 0 : index
    %128 = vector.load %arg4[%c0_31, %c0_32, %c0_33] : memref<1x8x128xf32, #tpu.memory_space<vmem>>, vector<1x8x128xf32>
    %129 = vector.shape_cast %128 : vector<1x8x128xf32> to vector<8x128xf32>
    %130 = vector.shape_cast %127 : vector<8x128xf32> to vector<1x8x128xf32>
    tpu.vector_store %arg4[%c0_31, %c0_32, %c0_33], %130 {strides = array<i32>} : memref<1x8x128xf32, #tpu.memory_space<vmem>>, vector<1x8x128xf32>,
    return
  }
  func.func @transform_0(%arg0: i32) -> (i32, i32, i32, i32) {
    %c0_i32 = arith.constant 0 : i32
    %c0_i32_0 = arith.constant 0 : i32
    %c0_i32_1 = arith.constant 0 : i32
    %c0_i32_2 = arith.constant 0 : i32
    return %arg0, %c0_i32, %c0_i32_0, %c0_i32_1 : i32, i32, i32, i32
  }
  func.func @transform_1(%arg0: i32) -> (i32, i32, i32, i32) {
    %c0_i32 = arith.constant 0 : i32
    %c0_i32_0 = arith.constant 0 : i32
    %c0_i32_1 = arith.constant 0 : i32
    %c0_i32_2 = arith.constant 0 : i32
    return %arg0, %c0_i32, %c0_i32_0, %c0_i32_1 : i32, i32, i32, i32
  }
  func.func @transform_2(%arg0: i32) -> (i32, i32) {
    %c0_i32 = arith.constant 0 : i32
    %c0_i32_0 = arith.constant 0 : i32
    %c0_i32_1 = arith.constant 0 : i32
    return %c0_i32, %c0_i32_0 : i32, i32
  }
  func.func @transform_3(%arg0: i32) -> (i32, i32, i32) {
    %c0_i32 = arith.constant 0 : i32
    %c0_i32_0 = arith.constant 0 : i32
    %c0_i32_1 = arith.constant 0 : i32
    return %arg0, %c0_i32, %c0_i32_0 : i32, i32, i32
  }
}

</mosaic_0001>

<llo_original>
// kernel: tpu_custom_call.1
$region0: #{tpu_custom_call.1}
  #allocation0 [shape = 'u32[]', space=smem, size = 0x4, offset = 0x4, fixed_abs, tag = 'smem constant byte address 0x4 - core index']
  #allocation1 [shape = 'u32[144,128]{1,0:T(1,128)}', space=vmem, size = 0x12000, scoped, tag = 'internal scratch']
  %s0 = inlined_call_operand.hbm [shape: f32[2,3,32,32], index: 0, kind: input, shape index: {}]
  %s1 = inlined_call_operand.hbm [shape: f32[2,3,32,32], index: 1, kind: input, shape index: {}]
  %s2 = inlined_call_operand.hbm [shape: f32[32,128], index: 2, kind: input, shape index: {}]
  %s3 = inlined_call_operand.hbm [shape: f32[2,8,128], index: 3, kind: output, shape index: {}]
  %s4 = sld [smem:[#allocation0]]
  $region57: #{tpu_custom_call.1} parent=0
    _
  %s6 = ssub.s32 1, %s4
  %s7 = scalar_select 0, %s6, %s4
  $region1: #{tpu_custom_call.1} parent=0
    #allocation2 [shape = 'u8[98304]{0}', space=vmem, size = 0x18000, scoped, tag = 'input window, operand 0']
    #allocation3 [shape = 's32[2]{0}', space=sflag, size = 0x8, scoped, tag = 'scoped memory for tpu_custom_call.1']
    #allocation4 [shape = 's32[2]{0}', space=sflag, size = 0x8, scoped, tag = 'scoped memory for tpu_custom_call.1']
    #allocation5 [shape = 'u8[98304]{0}', space=vmem, size = 0x18000, scoped, tag = 'input window, operand 1']
    #allocation6 [shape = 's32[2]{0}', space=sflag, size = 0x8, scoped, tag = 'scoped memory for tpu_custom_call.1']
    #allocation7 [shape = 'u8[16384]{0}', space=vmem, size = 0x4000, scoped, tag = 'input window, operand 2, single buffered']
    #allocation8 [shape = 'u8[8192]{0}', space=vmem, size = 0x2000, scoped, tag = 'output window, operand 0']
    %8 = vsyncpa [#allocation3], 0
    %s9 = scalar_lea.sflag [#allocation3], 1
    %10 = vsyncpa %s9, 0
    %11 = vsyncpa [#allocation6], 0
    %s12 = scalar_lea.sflag [#allocation6], 1
    %13 = vsyncpa %s12, 0
    %14 = vsyncpa [#allocation4], 0
    %s15 = scalar_lea.sflag [#allocation4], 1
    %16 = vsyncpa %s15, 0
    loop: start=0, step=1, limit=4
    $region2: #{tpu_custom_call.1} parent=1 // loop_pre_header
      _
    $region3: #{tpu_custom_call.1} parent=1 // loop_header
      %s18 = sphi 0, %s22
      %p19 = scmp.ge.s32.totalorder %s18, 4
      %s28 = sphi 0, %s30
      %s31 = sphi 0, %s28
      %s32 = sphi 0, %s31
      %s48 = sphi 0, %s32
      %s54 = sphi 0, %s56
      %s57 = sphi 0, %s54
      %s58 = sphi 0, %s57
      %s74 = sphi 0, %s58
      %s78 = sphi 0, %s78
      %s80 = sphi 0, %s78
      %s81 = sphi 0, %s80
      %s95 = sphi 0, %s81
      %s101 = sphi 0, %s103
      %s104 = sphi 0, %s101
      %s105 = sphi 0, %s104
      %s121 = sphi 0, %s105
    $region4: #{tpu_custom_call.1} parent=1 // loop_header_branch
      %21 = sbr.rel (%p19) target = $region8
    $region5: #{tpu_custom_call.1} parent=1 // loop_body
      %s23 = ssub.s32 %s18, 1
      %s24 = ssub.s32 %s18, 2
      %s25 = sadd.s32 %s18, 1
      %s26 = ssub.s32 %s18, %s25
      %p27 = scmp.eq.s32.totalorder %s26, 0
      %s29 = sadd.s32 %s28, 1
      %s30 = scalar_select %p27, %s28, %s29
      %p33 = pneg %p27
      %p34 = scmp.eq.s32.totalorder %s18, 1
      %p35 = por %p33, %p34
      %p36 = scmp.ne.s32.totalorder %s28, %s31
      %p37 = scmp.eq.s32.totalorder %s18, 0
      %p38 = por %p36, %p37
      %p39 = scmp.ne.s32.totalorder %s28, %s31
      %p40 = scmp.eq.s32.totalorder %s23, 1
      %p41 = por %p39, %p40
      %p42 = scmp.ne.s32.totalorder %s31, %s32
      %p43 = scmp.eq.s32.totalorder %s23, 0
      %p44 = por %p42, %p43
      %p45 = scmp.ne.s32.totalorder %s31, %s32
      %p46 = scmp.eq.s32.totalorder %s24, 1
      %p47 = por %p45, %p46
      %p49 = scmp.ne.s32.totalorder %s32, %s48
      %p50 = scmp.eq.s32.totalorder %s24, 0
      %p51 = por %p49, %p50
      %s52 = ssub.s32 %s18, %s25
      %p53 = scmp.eq.s32.totalorder %s52, 0
      %s55 = sadd.s32 %s54, 1
      %s56 = scalar_select %p53, %s54, %s55
      %p59 = pneg %p53
      %p60 = scmp.eq.s32.totalorder %s18, 1
      %p61 = por %p59, %p60
      %p62 = scmp.ne.s32.totalorder %s54, %s57
      %p63 = scmp.eq.s32.totalorder %s18, 0
      %p64 = por %p62, %p63
      %p65 = scmp.ne.s32.totalorder %s54, %s57
      %p66 = scmp.eq.s32.totalorder %s23, 1
      %p67 = por %p65, %p66
      %p68 = scmp.ne.s32.totalorder %s57, %s58
      %p69 = scmp.eq.s32.totalorder %s23, 0
      %p70 = por %p68, %p69
      %p71 = scmp.ne.s32.totalorder %s57, %s58
      %p72 = scmp.eq.s32.totalorder %s24, 1
      %p73 = por %p71, %p72
      %p75 = scmp.ne.s32.totalorder %s58, %s74
      %p76 = scmp.eq.s32.totalorder %s24, 0
      %p77 = por %p75, %p76
      %s79 = sadd.s32 %s78, 1
      %p82 = scmp.eq.s32.totalorder %s18, 1
      %p83 = scmp.ne.s32.totalorder %s78, %s80
      %p84 = scmp.eq.s32.totalorder %s18, 0
      %p85 = por %p83, %p84
      %p86 = scmp.ne.s32.totalorder %s78, %s80
      %p87 = scmp.eq.s32.totalorder %s23, 1
      %p88 = por %p86, %p87
      %p89 = scmp.ne.s32.totalorder %s80, %s81
      %p90 = scmp.eq.s32.totalorder %s23, 0
      %p91 = por %p89, %p90
      %p92 = scmp.ne.s32.totalorder %s80, %s81
      %p93 = scmp.eq.s32.totalorder %s24, 1
      %p94 = por %p92, %p93
      %p96 = scmp.ne.s32.totalorder %s81, %s95
      %p97 = scmp.eq.s32.totalorder %s24, 0
      %p98 = por %p96, %p97
      %s99 = ssub.s32 %s18, %s25
      %p100 = scmp.eq.s32.totalorder %s99, 0
      %s102 = sadd.s32 %s101, 1
      %s103 = scalar_select %p100, %s101, %s102
      %p106 = pneg %p100
      %p107 = scmp.eq.s32.totalorder %s18, 1
      %p108 = por %p106, %p107
      %p109 = scmp.ne.s32.totalorder %s101, %s104
      %p110 = scmp.eq.s32.totalorder %s18, 0
      %p111 = por %p109, %p110
      %p112 = scmp.ne.s32.totalorder %s101, %s104
      %p113 = scmp.eq.s32.totalorder %s23, 1
      %p114 = por %p112, %p113
      %p115 = scmp.ne.s32.totalorder %s104, %s105
      %p116 = scmp.eq.s32.totalorder %s23, 0
      %p117 = por %p115, %p116
      %p118 = scmp.ne.s32.totalorder %s104, %s105
      %p119 = scmp.eq.s32.totalorder %s24, 1
      %p120 = por %p118, %p119
      %p122 = scmp.ne.s32.totalorder %s105, %s121
      %p123 = scmp.eq.s32.totalorder %s24, 0
      %p124 = por %p122, %p123
      %p125 = scmp.le.s32.totalorder 1, %s18
      %p126 = scmp.lt.s32.totalorder %s18, 3
      %p127 = pnand %p125, %p126
      %p128 = pneg %p127
      // Predicated region
      $region9: #{tpu_custom_call.1} parent=5 // pred_check
        _
      $region10: #{tpu_custom_call.1} parent=5 // pred_check_branch
        %130 = sbr.rel (%p127) target = $region12
      $region11: #{tpu_custom_call.1} parent=5 // pred_region
        %s131 = ssub.s32 %s18, 1
        // Predicated region
        $region13: #{tpu_custom_call.1} parent=11 // pred_check
          %p132 = pneg %p91
        $region14: #{tpu_custom_call.1} parent=11 // pred_check_branch
          %134 = sbr.rel (%p132) target = $region16
        $region15: #{tpu_custom_call.1} parent=11 // pred_region
          %s136 = ssub.s32 512, 512
          %137 = vsyncadd [#allocation6], %s136
          %s138 = sshll.u32 [#allocation7], 4
          %s139 = int_to_ptr.vmem [resolvable:$true] %s138
          %144 = dma.hbm_to_vmem [thread:$0]  %s2, 512, %s139, [#allocation6], 128, 128, 8
        $region16: #{tpu_custom_call.1} parent=11 // pred_fallthru
          _
      $region12: #{tpu_custom_call.1} parent=5 // pred_fallthru
        _
      %p145 = scmp.lt.s32.totalorder %s18, 2
      // Predicated region
      $region17: #{tpu_custom_call.1} parent=5 // pred_check
        %p146 = pneg %p145
      $region18: #{tpu_custom_call.1} parent=5 // pred_check_branch
        %148 = sbr.rel (%p146) target = $region20
      $region19: #{tpu_custom_call.1} parent=5 // pred_region
        // Predicated region
        $region21: #{tpu_custom_call.1} parent=19 // pred_check
          %p149 = pneg %p38
        $region22: #{tpu_custom_call.1} parent=19 // pred_check_branch
          %151 = sbr.rel (%p149) target = $region24
        $region23: #{tpu_custom_call.1} parent=19 // pred_region
          %s152 = sand.u32 %s28, 1
          %s153 = scalar_lea.sflag [#allocation3], %s152
          %s154 = sand.u32 %s28, 1
          %s155 = smul.addr %s154, 96
          %s156 = scalar_lea.vmem [#allocation2], %s155
          %s158 = ssub.s32 1536, 1536
          %159 = vsyncadd %s153, %s158
          %s160 = smul.addr %s18, 12
          %s161 = smul.addr %s160, 128
          %s162 = scalar_lea.hbm %s0, %s161
          %s163 = sshll.u32 %s156, 4
          %s164 = int_to_ptr.vmem [resolvable:$true] %s163
          %169 = dma.hbm_to_vmem [thread:$0]  %s162, 1536, %s164, %s153, 128, 128, 8
        $region24: #{tpu_custom_call.1} parent=19 // pred_fallthru
          _
        // Predicated region
        $region25: #{tpu_custom_call.1} parent=19 // pred_check
          %p170 = pneg %p64
        $region26: #{tpu_custom_call.1} parent=19 // pred_check_branch
          %172 = sbr.rel (%p170) target = $region28
        $region27: #{tpu_custom_call.1} parent=19 // pred_region
          %s173 = sand.u32 %s18, 1
          %s174 = scalar_lea.sflag [#allocation6], %s173
          %s175 = sand.u32 %s54, 1
          %s176 = smul.addr %s175, 96
          %s177 = scalar_lea.vmem [#allocation5], %s176
          %s179 = ssub.s32 1536, 1536
          %180 = vsyncadd %s174, %s179
          %s181 = smul.addr %s18, 12
          %s182 = smul.addr %s181, 128
          %s183 = scalar_lea.hbm %s1, %s182
          %s184 = sshll.u32 %s177, 4
          %s185 = int_to_ptr.vmem [resolvable:$true] %s184
          %190 = dma.hbm_to_vmem [thread:$0]  %s183, 1536, %s185, %s174, 128, 128, 8
        $region28: #{tpu_custom_call.1} parent=19 // pred_fallthru
          _
      $region20: #{tpu_custom_call.1} parent=5 // pred_fallthru
        _
      %p191 = scmp.le.s32.totalorder 1, %s18
      %p192 = scmp.lt.s32.totalorder %s18, 3
      %p193 = pnand %p191, %p192
      %p194 = pneg %p193
      // Predicated region
      $region29: #{tpu_custom_call.1} parent=5 // pred_check
        _
      $region30: #{tpu_custom_call.1} parent=5 // pred_check_branch
        %196 = sbr.rel (%p193) target = $region32
      $region31: #{tpu_custom_call.1} parent=5 // pred_region
        %s197 = ssub.s32 %s18, 1
        %s198 = sand.u32 %s31, 1
        %s199 = scalar_lea.sflag [#allocation3], %s198
        %s200 = sand.u32 %s31, 1
        %s201 = smul.addr %s200, 96
        %s202 = scalar_lea.vmem [#allocation2], %s201
        // Predicated region
        $region33: #{tpu_custom_call.1} parent=31 // pred_check
          %p203 = pneg %p44
        $region34: #{tpu_custom_call.1} parent=31 // pred_check_branch
          %205 = sbr.rel (%p203) target = $region36
        $region35: #{tpu_custom_call.1} parent=31 // pred_region
          %206 = dma.done %s199, 1536
        $region36: #{tpu_custom_call.1} parent=31 // pred_fallthru
          _
        %s207 = sand.u32 %s23, 1
        %s208 = scalar_lea.sflag [#allocation6], %s207
        %s209 = sand.u32 %s57, 1
        %s210 = smul.addr %s209, 96
        %s211 = scalar_lea.vmem [#allocation5], %s210
        // Predicated region
        $region37: #{tpu_custom_call.1} parent=31 // pred_check
          %p212 = pneg %p70
        $region38: #{tpu_custom_call.1} parent=31 // pred_check_branch
          %214 = sbr.rel (%p212) target = $region40
        $region39: #{tpu_custom_call.1} parent=31 // pred_region
          %215 = dma.done %s208, 1536
        $region40: #{tpu_custom_call.1} parent=31 // pred_fallthru
          _
        // Predicated region
        $region41: #{tpu_custom_call.1} parent=31 // pred_check
          %p216 = pneg %p91
        $region42: #{tpu_custom_call.1} parent=31 // pred_check_branch
          %218 = sbr.rel (%p216) target = $region44
        $region43: #{tpu_custom_call.1} parent=31 // pred_region
          %219 = dma.done [#allocation6], 512
        $region44: #{tpu_custom_call.1} parent=31 // pred_fallthru
          _
        %s220 = sand.u32 %s31, 1
        %s221 = scalar_lea.sflag [#allocation3], %s220
        %s222 = sand.u32 %s31, 1
        %s223 = smul.addr %s222, 96
        %s224 = scalar_lea.vmem [#allocation2], %s223
        %p225 = pneg %p44
        %p226 = pneg %p41
        %s227 = sand.u32 %s23, 1
        %s228 = scalar_lea.sflag [#allocation6], %s227
        %s229 = sand.u32 %s57, 1
        %s230 = smul.addr %s229, 96
        %s231 = scalar_lea.vmem [#allocation5], %s230
        %p232 = pneg %p70
        %p233 = pneg %p67
        %p234 = pneg %p91
        %p235 = pneg %p88
        %p236 = pneg %p117
        %p237 = pneg %p114
        %s238 = sand.u32 %s104, 1
        %s239 = scalar_lea.sflag [#allocation4], %s238
        %s240 = sand.u32 %s104, 1
        %s241 = smul.addr %s240, 8
        %s242 = scalar_lea.vmem [#allocation8], %s241
        %v243 = vld [vmem:[%s202] sm:$0xff]
        %v244 = vld [vmem:[%s202 + $0x8] sm:$0xff]
        %v245 = vld [vmem:[%s202 + $0x10] sm:$0xff]
        %v246 = vld [vmem:[%s202 + $0x18] sm:$0xff]
        %v247 = vld [vmem:[%s202 + $0x20] sm:$0xff]
        %v248 = vld [vmem:[%s202 + $0x28] sm:$0xff]
        %v249 = vld [vmem:[%s202 + $0x30] sm:$0xff]
        %v250 = vld [vmem:[%s202 + $0x38] sm:$0xff]
        %v251 = vld [vmem:[%s202 + $0x40] sm:$0xff]
        %v252 = vld [vmem:[%s202 + $0x48] sm:$0xff]
        %v253 = vld [vmem:[%s202 + $0x50] sm:$0xff]
        %v254 = vld [vmem:[%s202 + $0x58] sm:$0xff]
        %v255 = vld [vmem:[%s211] sm:$0xff]
        %v256 = vld [vmem:[%s211 + $0x8] sm:$0xff]
        %v257 = vld [vmem:[%s211 + $0x10] sm:$0xff]
        %v258 = vld [vmem:[%s211 + $0x18] sm:$0xff]
        %v259 = vld [vmem:[%s211 + $0x20] sm:$0xff]
        %v260 = vld [vmem:[%s211 + $0x28] sm:$0xff]
        %v261 = vld [vmem:[%s211 + $0x30] sm:$0xff]
        %v262 = vld [vmem:[%s211 + $0x38] sm:$0xff]
        %v263 = vld [vmem:[%s211 + $0x40] sm:$0xff]
        %v264 = vld [vmem:[%s211 + $0x48] sm:$0xff]
        %v265 = vld [vmem:[%s211 + $0x50] sm:$0xff]
        %v266 = vld [vmem:[%s211 + $0x58] sm:$0xff]
        %v267 = vsub.f32 %v243, %v255
        %v268 = vsub.f32 %v244, %v256
        %v269 = vsub.f32 %v245, %v257
        %v270 = vsub.f32 %v246, %v258
        %v271 = vsub.f32 %v247, %v259
        %v272 = vsub.f32 %v248, %v260
        %v273 = vsub.f32 %v249, %v261
        %v274 = vsub.f32 %v250, %v262
        %v275 = vsub.f32 %v251, %v263
        %v276 = vsub.f32 %v252, %v264
        %v277 = vsub.f32 %v253, %v265
        %v278 = vsub.f32 %v254, %v266
        %v279 = vmul.f32 %v267, %v267
        %v280 = vmul.f32 %v268, %v268
        %v281 = vmul.f32 %v269, %v269
        %v282 = vmul.f32 %v270, %v270
        %v283 = vmul.f32 %v271, %v271
        %v284 = vmul.f32 %v272, %v272
        %v285 = vmul.f32 %v273, %v273
        %v286 = vmul.f32 %v274, %v274
        %v287 = vmul.f32 %v275, %v275
        %v288 = vmul.f32 %v276, %v276
        %v289 = vmul.f32 %v277, %v277
        %v290 = vmul.f32 %v278, %v278
        %v291 = vadd.f32 %v279, %v283
        %v292 = vadd.f32 %v280, %v284
        %v293 = vadd.f32 %v281, %v285
        %v294 = vadd.f32 %v282, %v286
        %v295 = vadd.f32 %v291, %v287
        %v296 = vadd.f32 %v292, %v288
        %v297 = vadd.f32 %v293, %v289
        %v298 = vadd.f32 %v294, %v290
        %vm299 = vcmask 261120
        %v300 = vsel %vm299, %v295, 0.0
        %v301 = vsel %vm299, %v296, 0.0
        %v302 = vadd.f32 %v300, %v301
        %v303 = vsel %vm299, %v297, 0.0
        %v304 = vadd.f32 %v302, %v303
        %v305 = vsel %vm299, %v298, 0.0
        %v306 = vadd.f32 %v304, %v305
        %307 = vadd.xlane.f32.xlu0 %v306
        %v308 = vpop.xlane.xlu0 %307
        %v309 = vrot.slane %v308, 4
        %v310 = vadd.f32 %v308, %v309
        %v311 = vrot.slane %v310, 2
        %v312 = vadd.f32 %v310, %v311
        %v313 = vrot.slane %v312, 1
        %v314 = vadd.f32 %v312, %v313
        %s315 = vtos %v314
        %v316 = vrsqrt.pop %v295
        %v317 = vmul.f32 %v295, %v316
        %vm318 = vcmp.eq.f32.partialorder %v295, inf
        %v319 = vsel %vm318, %v295, %v317
        %vm320 = vcmp.eq.f32.partialorder %v295, 0.0
        %v321 = vand.u32 %v295, 2147483648
        %v322 = vsel %vm320, %v321, %v319
        %v323 = vrsqrt.pop %v296
        %v324 = vmul.f32 %v296, %v323
        %vm325 = vcmp.eq.f32.partialorder %v296, inf
        %v326 = vsel %vm325, %v296, %v324
        %vm327 = vcmp.eq.f32.partialorder %v296, 0.0
        %v328 = vand.u32 %v296, 2147483648
        %v329 = vsel %vm327, %v328, %v326
        %v330 = vrsqrt.pop %v297
        %v331 = vmul.f32 %v297, %v330
        %vm332 = vcmp.eq.f32.partialorder %v297, inf
        %v333 = vsel %vm332, %v297, %v331
        %vm334 = vcmp.eq.f32.partialorder %v297, 0.0
        %v335 = vand.u32 %v297, 2147483648
        %v336 = vsel %vm334, %v335, %v333
        %v337 = vrsqrt.pop %v298
        %v338 = vmul.f32 %v298, %v337
        %vm339 = vcmp.eq.f32.partialorder %v298, inf
        %v340 = vsel %vm339, %v298, %v338
        %vm341 = vcmp.eq.f32.partialorder %v298, 0.0
        %v342 = vand.u32 %v298, 2147483648
        %v343 = vsel %vm341, %v342, %v340
        %v344 = vsel %vm299, %v322, 0.0
        %v345 = vsel %vm299, %v329, 0.0
        %v346 = vadd.f32 %v344, %v345
        %v347 = vsel %vm299, %v336, 0.0
        %v348 = vadd.f32 %v346, %v347
        %v349 = vsel %vm299, %v343, 0.0
        %v350 = vadd.f32 %v348, %v349
        %351 = vadd.xlane.f32.xlu0 %v350
        %v352 = vpop.xlane.xlu0 %351
        %v353 = vrot.slane %v352, 4
        %v354 = vadd.f32 %v352, %v353
        %v355 = vrot.slane %v354, 2
        %v356 = vadd.f32 %v354, %v355
        %v357 = vrot.slane %v356, 1
        %v358 = vadd.f32 %v356, %v357
        %s359 = vtos %v358
        %v360 = vmul.f32 %v243, %v243
        %v361 = vmul.f32 %v244, %v244
        %v362 = vmul.f32 %v245, %v245
        %v363 = vmul.f32 %v246, %v246
        %v364 = vmul.f32 %v247, %v247
        %v365 = vmul.f32 %v248, %v248
        %v366 = vmul.f32 %v249, %v249
        %v367 = vmul.f32 %v250, %v250
        %v368 = vmul.f32 %v251, %v251
        %v369 = vmul.f32 %v252, %v252
        %v370 = vmul.f32 %v253, %v253
        %v371 = vmul.f32 %v254, %v254
        %v372 = vmul.f32 %v255, %v255
        %v373 = vmul.f32 %v256, %v256
        %v374 = vmul.f32 %v257, %v257
        %v375 = vmul.f32 %v258, %v258
        %v376 = vmul.f32 %v259, %v259
        %v377 = vmul.f32 %v260, %v260
        %v378 = vmul.f32 %v261, %v261
        %v379 = vmul.f32 %v262, %v262
        %v380 = vmul.f32 %v263, %v263
        %v381 = vmul.f32 %v264, %v264
        %v382 = vmul.f32 %v265, %v265
        %v383 = vmul.f32 %v266, %v266
        %v384 = vmul.f32 %v243, %v255
        %v385 = vmul.f32 %v244, %v256
        %v386 = vmul.f32 %v245, %v257
        %v387 = vmul.f32 %v246, %v258
        %v388 = vmul.f32 %v247, %v259
        %v389 = vmul.f32 %v248, %v260
        %v390 = vmul.f32 %v249, %v261
        %v391 = vmul.f32 %v250, %v262
        %v392 = vmul.f32 %v251, %v263
        %v393 = vmul.f32 %v252, %v264
        %v394 = vmul.f32 %v253, %v265
        %v395 = vmul.f32 %v254, %v266
        %v396 = vld [vmem:[#allocation7] sm:$0xff]
        %v397 = vld [vmem:[#allocation7 + $0x8] sm:$0xff]
        %v398 = vld [vmem:[#allocation7 + $0x10] sm:$0xff]
        %v399 = vld [vmem:[#allocation7 + $0x18] sm:$0xff]
        %v401 = vsel %vm299, %v243, 0
        %v404 = vsel %vm299, %v244, 0
        %v407 = vsel %vm299, %v245, 0
        %v410 = vsel %vm299, %v246, 0
        %v413 = vsel %vm299, %v247, 0
        %v416 = vsel %vm299, %v248, 0
        %v419 = vsel %vm299, %v249, 0
        %v422 = vsel %vm299, %v250, 0
        %v425 = vsel %vm299, %v251, 0
        %v428 = vsel %vm299, %v252, 0
        %v431 = vsel %vm299, %v253, 0
        %v434 = vsel %vm299, %v254, 0
        %v437 = vsel %vm299, %v255, 0
        %v440 = vsel %vm299, %v256, 0
        %v443 = vsel %vm299, %v257, 0
        %v446 = vsel %vm299, %v258, 0
        %v449 = vsel %vm299, %v259, 0
        %v452 = vsel %vm299, %v260, 0
        %v455 = vsel %vm299, %v261, 0
        %v458 = vsel %vm299, %v262, 0
        %v461 = vsel %vm299, %v263, 0
        %v464 = vsel %vm299, %v264, 0
        %v467 = vsel %vm299, %v265, 0
        %v470 = vsel %vm299, %v266, 0
        %v473 = vsel %vm299, %v360, 0
        %v476 = vsel %vm299, %v361, 0
        %v479 = vsel %vm299, %v362, 0
        %v482 = vsel %vm299, %v363, 0
        %v485 = vsel %vm299, %v364, 0
        %v488 = vsel %vm299, %v365, 0
        %v491 = vsel %vm299, %v366, 0
        %v494 = vsel %vm299, %v367, 0
        %v497 = vsel %vm299, %v368, 0
        %v500 = vsel %vm299, %v369, 0
        %v503 = vsel %vm299, %v370, 0
        %v506 = vsel %vm299, %v371, 0
        %v509 = vsel %vm299, %v372, 0
        %v512 = vsel %vm299, %v373, 0
        %v515 = vsel %vm299, %v374, 0
        %v518 = vsel %vm299, %v375, 0
        %v521 = vsel %vm299, %v376, 0
        %v524 = vsel %vm299, %v377, 0
        %v527 = vsel %vm299, %v378, 0
        %v530 = vsel %vm299, %v379, 0
        %v533 = vsel %vm299, %v380, 0
        %v536 = vsel %vm299, %v381, 0
        %v539 = vsel %vm299, %v382, 0
        %v542 = vsel %vm299, %v383, 0
        %v545 = vsel %vm299, %v384, 0
        %v548 = vsel %vm299, %v385, 0
        %v551 = vsel %vm299, %v386, 0
        %v554 = vsel %vm299, %v387, 0
        %v557 = vsel %vm299, %v388, 0
        %v560 = vsel %vm299, %v389, 0
        %v563 = vsel %vm299, %v390, 0
        %v566 = vsel %vm299, %v391, 0
        %v569 = vsel %vm299, %v392, 0
        %v572 = vsel %vm299, %v393, 0
        %v575 = vsel %vm299, %v394, 0
        %v578 = vsel %vm299, %v395, 0
        %580 = vmatprep.subr.mxu0 0.0
        %581 = vmatpush1.msra.mxu0 %v396
        %582 = vmatprep.subr.mxu0 0.0
        %583 = vmatpush1.msra.mxu0 %v397
        %584 = vmatprep.subr.mxu0 0.0
        %585 = vmatpush1.msra.mxu0 %v398
        %586 = vmatprep.subr.mxu0 0.0
        %587 = vmatpush1.msra.mxu0 %v399
        %588 = vmatprep.subr.mxu0 0.0
        %589 = vmatpush1.msra.mxu0 0.0
        %590 = vmatprep.subr.mxu0 0.0
        %591 = vmatpush1.msra.mxu0 0.0
        %592 = vmatprep.subr.mxu0 0.0
        %593 = vmatpush1.msra.mxu0 0.0
        %594 = vmatprep.subr.mxu0 0.0
        %595 = vmatpush1.msra.mxu0 0.0
        %596 = vmatprep.subr.mxu0 0.0
        %597 = vmatpush1.msra.mxu0 0.0
        %598 = vmatprep.subr.mxu0 0.0
        %599 = vmatpush1.msra.mxu0 0.0
        %600 = vmatprep.subr.mxu0 0.0
        %601 = vmatpush1.msra.mxu0 0.0
        %602 = vmatprep.subr.mxu0 0.0
        %603 = vmatpush1.msra.mxu0 0.0
        %604 = vmatprep.subr.mxu0 0.0
        %605 = vmatpush1.msra.mxu0 0.0
        %606 = vmatprep.subr.mxu0 0.0
        %607 = vmatpush1.msra.mxu0 0.0
        %608 = vmatprep.subr.mxu0 0.0
        %609 = vmatpush1.msra.mxu0 0.0
        %610 = vmatprep.subr.mxu0 0.0
        %611 = vmatpush1.msra.mxu0 0.0
        %612 = vmatprep.subr.mxu0 0.0
        %613 = vmatpush1.msra.mxu0 0.0
        %614 = vmatprep.subr.mxu0 0.0
        %615 = vmatpush1.msra.mxu0 0.0
        %616 = vmatprep.subr.mxu0 0.0
        %617 = vmatpush1.msra.mxu0 0.0
        %618 = vmatprep.subr.mxu0 0.0
        %619 = vmatpush1.msra.mxu0 0.0
        %620 = vmatprep.subr.mxu0 0.0
        %621 = vmatpush1.msra.mxu0 0.0
        %622 = vmatprep.subr.mxu0 0.0
        %623 = vmatpush1.msra.mxu0 0.0
        %624 = vmatprep.subr.mxu0 0.0
        %625 = vmatpush1.msra.mxu0 0.0
        %626 = vmatprep.subr.mxu0 0.0
        %627 = vmatpush1.msra.mxu0 0.0
        %628 = vmatprep.subr.mxu0 0.0
        %629 = vmatpush1.msra.mxu0 0.0
        %630 = vmatprep.subr.mxu0 0.0
        %631 = vmatpush1.msra.mxu0 0.0
        %632 = vmatprep.subr.mxu0 0.0
        %633 = vmatpush1.msra.mxu0 0.0
        %634 = vmatprep.subr.mxu0 0.0
        %635 = vmatpush1.msra.mxu0 0.0
        %636 = vmatprep.subr.mxu0 0.0
        %637 = vmatpush1.msra.mxu0 0.0
        %638 = vmatprep.subr.mxu0 0.0
        %639 = vmatpush1.msra.mxu0 0.0
        %640 = vmatprep.subr.mxu0 0.0
        %641 = vmatpush1.msra.mxu0 0.0
        %642 = vmatprep.subr.mxu0 0.0
        %643 = vmatpush1.msra.mxu0 0.0
        %644 = vmatprep.mubr.f32.mxu0 0.0
        %645 = vmatmul.mubr.f32.gmra.mrb[0].mxu0 %v401
        %v646 = vpop.f32.mrb[0].mxu0
        %v647 = vadd.f32 0.0, %v646
        %v648 = vpop.f32.mrb[0].mxu0
        %649 = vmatprep.mubr.f32.mxu0 0.0
        %650 = vmatmul.mubr.f32.gmra.mrb[0].mxu0 %v404
        %v651 = vpop.f32.mrb[0].mxu0
        %v652 = vadd.f32 0.0, %v651
        %v653 = vpop.f32.mrb[0].mxu0
        %654 = vmatprep.mubr.f32.mxu0 0.0
        %655 = vmatmul.mubr.f32.gmra.mrb[0].mxu0 %v407
        %v656 = vpop.f32.mrb[0].mxu0
        %v657 = vadd.f32 0.0, %v656
        %v658 = vpop.f32.mrb[0].mxu0
        %659 = vmatprep.mubr.f32.mxu0 0.0
        %660 = vmatmul.mubr.f32.gmra.mrb[0].mxu0 %v410
        %v661 = vpop.f32.mrb[0].mxu0
        %v662 = vadd.f32 0.0, %v661
        %v663 = vpop.f32.mrb[0].mxu0
        %664 = vmatprep.mubr.f32.mxu0 0.0
        %665 = vmatmul.mubr.f32.gmra.mrb[0].mxu0 %v413
        %v666 = vpop.f32.mrb[0].mxu0
        %v667 = vadd.f32 0.0, %v666
        %v668 = vpop.f32.mrb[0].mxu0
        %669 = vmatprep.mubr.f32.mxu0 0.0
        %670 = vmatmul.mubr.f32.gmra.mrb[0].mxu0 %v416
        %v671 = vpop.f32.mrb[0].mxu0
        %v672 = vadd.f32 0.0, %v671
        %v673 = vpop.f32.mrb[0].mxu0
        %674 = vmatprep.mubr.f32.mxu0 0.0
        %675 = vmatmul.mubr.f32.gmra.mrb[0].mxu0 %v419
        %v676 = vpop.f32.mrb[0].mxu0
        %v677 = vadd.f32 0.0, %v676
        %v678 = vpop.f32.mrb[0].mxu0
        %679 = vmatprep.mubr.f32.mxu0 0.0
        %680 = vmatmul.mubr.f32.gmra.mrb[0].mxu0 %v422
        %v681 = vpop.f32.mrb[0].mxu0
        %v682 = vadd.f32 0.0, %v681
        %v683 = vpop.f32.mrb[0].mxu0
        %684 = vmatprep.mubr.f32.mxu0 0.0
        %685 = vmatmul.mubr.f32.gmra.mrb[0].mxu0 %v425
        %v686 = vpop.f32.mrb[0].mxu0
        %v687 = vadd.f32 0.0, %v686
        %v688 = vpop.f32.mrb[0].mxu0
        %689 = vmatprep.mubr.f32.mxu0 0.0
        %690 = vmatmul.mubr.f32.gmra.mrb[0].mxu0 %v428
        %v691 = vpop.f32.mrb[0].mxu0
        %v692 = vadd.f32 0.0, %v691
        %v693 = vpop.f32.mrb[0].mxu0
        %694 = vmatprep.mubr.f32.mxu0 0.0
        %695 = vmatmul.mubr.f32.gmra.mrb[0].mxu0 %v431
        %v696 = vpop.f32.mrb[0].mxu0
        %v697 = vadd.f32 0.0, %v696
        %v698 = vpop.f32.mrb[0].mxu0
        %699 = vmatprep.mubr.f32.mxu0 0.0
        %700 = vmatmul.mubr.f32.gmra.mrb[0].mxu0 %v434
        %v701 = vpop.f32.mrb[0].mxu0
        %v702 = vadd.f32 0.0, %v701
        %v703 = vpop.f32.mrb[0].mxu0
        %704 = vmatprep.mubr.f32.mxu0 0.0
        %705 = vmatmul.mubr.f32.gmra.mrb[0].mxu0 %v437
        %v706 = vpop.f32.mrb[0].mxu0
        %v707 = vadd.f32 0.0, %v706
        %v708 = vpop.f32.mrb[0].mxu0
        %709 = vmatprep.mubr.f32.mxu0 0.0
        %710 = vmatmul.mubr.f32.gmra.mrb[0].mxu0 %v440
        %v711 = vpop.f32.mrb[0].mxu0
        %v712 = vadd.f32 0.0, %v711
        %v713 = vpop.f32.mrb[0].mxu0
        %714 = vmatprep.mubr.f32.mxu0 0.0
        %715 = vmatmul.mubr.f32.gmra.mrb[0].mxu0 %v443
        %v716 = vpop.f32.mrb[0].mxu0
        %v717 = vadd.f32 0.0, %v716
        %v718 = vpop.f32.mrb[0].mxu0
        %719 = vmatprep.mubr.f32.mxu0 0.0
        %720 = vmatmul.mubr.f32.gmra.mrb[0].mxu0 %v446
        %v721 = vpop.f32.mrb[0].mxu0
        %v722 = vadd.f32 0.0, %v721
        %v723 = vpop.f32.mrb[0].mxu0
        %724 = vmatprep.mubr.f32.mxu0 0.0
        %725 = vmatmul.mubr.f32.gmra.mrb[0].mxu0 %v449
        %v726 = vpop.f32.mrb[0].mxu0
        %v727 = vadd.f32 0.0, %v726
        %v728 = vpop.f32.mrb[0].mxu0
        %729 = vmatprep.mubr.f32.mxu0 0.0
        %730 = vmatmul.mubr.f32.gmra.mrb[0].mxu0 %v452
        %v731 = vpop.f32.mrb[0].mxu0
        %v732 = vadd.f32 0.0, %v731
        %v733 = vpop.f32.mrb[0].mxu0
        %734 = vmatprep.mubr.f32.mxu0 0.0
        %735 = vmatmul.mubr.f32.gmra.mrb[0].mxu0 %v455
        %v736 = vpop.f32.mrb[0].mxu0
        %v737 = vadd.f32 0.0, %v736
        %v738 = vpop.f32.mrb[0].mxu0
        %739 = vmatprep.mubr.f32.mxu0 0.0
        %740 = vmatmul.mubr.f32.gmra.mrb[0].mxu0 %v458
        %v741 = vpop.f32.mrb[0].mxu0
        %v742 = vadd.f32 0.0, %v741
        %v743 = vpop.f32.mrb[0].mxu0
        %744 = vmatprep.mubr.f32.mxu0 0.0
        %745 = vmatmul.mubr.f32.gmra.mrb[0].mxu0 %v461
        %v746 = vpop.f32.mrb[0].mxu0
        %v747 = vadd.f32 0.0, %v746
        %v748 = vpop.f32.mrb[0].mxu0
        %749 = vmatprep.mubr.f32.mxu0 0.0
        %750 = vmatmul.mubr.f32.gmra.mrb[0].mxu0 %v464
        %v751 = vpop.f32.mrb[0].mxu0
        %v752 = vadd.f32 0.0, %v751
        %v753 = vpop.f32.mrb[0].mxu0
        %754 = vmatprep.mubr.f32.mxu0 0.0
        %755 = vmatmul.mubr.f32.gmra.mrb[0].mxu0 %v467
        %v756 = vpop.f32.mrb[0].mxu0
        %v757 = vadd.f32 0.0, %v756
        %v758 = vpop.f32.mrb[0].mxu0
        %759 = vmatprep.mubr.f32.mxu0 0.0
        %760 = vmatmul.mubr.f32.gmra.mrb[0].mxu0 %v470
        %v761 = vpop.f32.mrb[0].mxu0
        %v762 = vadd.f32 0.0, %v761
        %v763 = vpop.f32.mrb[0].mxu0
        %764 = vmatprep.mubr.f32.mxu0 0.0
        %765 = vmatmul.mubr.f32.gmra.mrb[0].mxu0 %v473
        %v766 = vpop.f32.mrb[0].mxu0
        %v767 = vadd.f32 0.0, %v766
        %v768 = vpop.f32.mrb[0].mxu0
        %769 = vmatprep.mubr.f32.mxu0 0.0
        %770 = vmatmul.mubr.f32.gmra.mrb[0].mxu0 %v476
        %v771 = vpop.f32.mrb[0].mxu0
        %v772 = vadd.f32 0.0, %v771
        %v773 = vpop.f32.mrb[0].mxu0
        %774 = vmatprep.mubr.f32.mxu0 0.0
        %775 = vmatmul.mubr.f32.gmra.mrb[0].mxu0 %v479
        %v776 = vpop.f32.mrb[0].mxu0
        %v777 = vadd.f32 0.0, %v776
        %v778 = vpop.f32.mrb[0].mxu0
        %779 = vmatprep.mubr.f32.mxu0 0.0
        %780 = vmatmul.mubr.f32.gmra.mrb[0].mxu0 %v482
        %v781 = vpop.f32.mrb[0].mxu0
        %v782 = vadd.f32 0.0, %v781
        %v783 = vpop.f32.mrb[0].mxu0
        %784 = vmatprep.mubr.f32.mxu0 0.0
        %785 = vmatmul.mubr.f32.gmra.mrb[0].mxu0 %v485
        %v786 = vpop.f32.mrb[0].mxu0
        %v787 = vadd.f32 0.0, %v786
        %v788 = vpop.f32.mrb[0].mxu0
        %789 = vmatprep.mubr.f32.mxu0 0.0
        %790 = vmatmul.mubr.f32.gmra.mrb[0].mxu0 %v488
        %v791 = vpop.f32.mrb[0].mxu0
        %v792 = vadd.f32 0.0, %v791
        %v793 = vpop.f32.mrb[0].mxu0
        %794 = vmatprep.mubr.f32.mxu0 0.0
        %795 = vmatmul.mubr.f32.gmra.mrb[0].mxu0 %v491
        %v796 = vpop.f32.mrb[0].mxu0
        %v797 = vadd.f32 0.0, %v796
        %v798 = vpop.f32.mrb[0].mxu0
        %799 = vmatprep.mubr.f32.mxu0 0.0
        %800 = vmatmul.mubr.f32.gmra.mrb[0].mxu0 %v494
        %v801 = vpop.f32.mrb[0].mxu0
        %v802 = vadd.f32 0.0, %v801
        %v803 = vpop.f32.mrb[0].mxu0
        %804 = vmatprep.mubr.f32.mxu0 0.0
        %805 = vmatmul.mubr.f32.gmra.mrb[0].mxu0 %v497
        %v806 = vpop.f32.mrb[0].mxu0
        %v807 = vadd.f32 0.0, %v806
        %v808 = vpop.f32.mrb[0].mxu0
        %809 = vmatprep.mubr.f32.mxu0 0.0
        %810 = vmatmul.mubr.f32.gmra.mrb[0].mxu0 %v500
        %v811 = vpop.f32.mrb[0].mxu0
        %v812 = vadd.f32 0.0, %v811
        %v813 = vpop.f32.mrb[0].mxu0
        %814 = vmatprep.mubr.f32.mxu0 0.0
        %815 = vmatmul.mubr.f32.gmra.mrb[0].mxu0 %v503
        %v816 = vpop.f32.mrb[0].mxu0
        %v817 = vadd.f32 0.0, %v816
        %v818 = vpop.f32.mrb[0].mxu0
        %819 = vmatprep.mubr.f32.mxu0 0.0
        %820 = vmatmul.mubr.f32.gmra.mrb[0].mxu0 %v506
        %v821 = vpop.f32.mrb[0].mxu0
        %v822 = vadd.f32 0.0, %v821
        %v823 = vpop.f32.mrb[0].mxu0
        %824 = vmatprep.mubr.f32.mxu0 0.0
        %825 = vmatmul.mubr.f32.gmra.mrb[0].mxu0 %v509
        %v826 = vpop.f32.mrb[0].mxu0
        %v827 = vadd.f32 0.0, %v826
        %v828 = vpop.f32.mrb[0].mxu0
        %829 = vmatprep.mubr.f32.mxu0 0.0
        %830 = vmatmul.mubr.f32.gmra.mrb[0].mxu0 %v512
        %v831 = vpop.f32.mrb[0].mxu0
        %v832 = vadd.f32 0.0, %v831
        %v833 = vpop.f32.mrb[0].mxu0
        %834 = vmatprep.mubr.f32.mxu0 0.0
        %835 = vmatmul.mubr.f32.gmra.mrb[0].mxu0 %v515
        %v836 = vpop.f32.mrb[0].mxu0
        %v837 = vadd.f32 0.0, %v836
        %v838 = vpop.f32.mrb[0].mxu0
        %839 = vmatprep.mubr.f32.mxu0 0.0
        %840 = vmatmul.mubr.f32.gmra.mrb[0].mxu0 %v518
        %v841 = vpop.f32.mrb[0].mxu0
        %v842 = vadd.f32 0.0, %v841
        %v843 = vpop.f32.mrb[0].mxu0
        %844 = vmatprep.mubr.f32.mxu0 0.0
        %845 = vmatmul.mubr.f32.gmra.mrb[0].mxu0 %v521
        %v846 = vpop.f32.mrb[0].mxu0
        %v847 = vadd.f32 0.0, %v846
        %v848 = vpop.f32.mrb[0].mxu0
        %849 = vmatprep.mubr.f32.mxu0 0.0
        %850 = vmatmul.mubr.f32.gmra.mrb[0].mxu0 %v524
        %v851 = vpop.f32.mrb[0].mxu0
        %v852 = vadd.f32 0.0, %v851
        %v853 = vpop.f32.mrb[0].mxu0
        %854 = vmatprep.mubr.f32.mxu0 0.0
        %855 = vmatmul.mubr.f32.gmra.mrb[0].mxu0 %v527
        %v856 = vpop.f32.mrb[0].mxu0
        %v857 = vadd.f32 0.0, %v856
        %v858 = vpop.f32.mrb[0].mxu0
        %859 = vmatprep.mubr.f32.mxu0 0.0
        %860 = vmatmul.mubr.f32.gmra.mrb[0].mxu0 %v530
        %v861 = vpop.f32.mrb[0].mxu0
        %v862 = vadd.f32 0.0, %v861
        %v863 = vpop.f32.mrb[0].mxu0
        %864 = vmatprep.mubr.f32.mxu0 0.0
        %865 = vmatmul.mubr.f32.gmra.mrb[0].mxu0 %v533
        %v866 = vpop.f32.mrb[0].mxu0
        %v867 = vadd.f32 0.0, %v866
        %v868 = vpop.f32.mrb[0].mxu0
        %869 = vmatprep.mubr.f32.mxu0 0.0
        %870 = vmatmul.mubr.f32.gmra.mrb[0].mxu0 %v536
        %v871 = vpop.f32.mrb[0].mxu0
        %v872 = vadd.f32 0.0, %v871
        %v873 = vpop.f32.mrb[0].mxu0
        %874 = vmatprep.mubr.f32.mxu0 0.0
        %875 = vmatmul.mubr.f32.gmra.mrb[0].mxu0 %v539
        %v876 = vpop.f32.mrb[0].mxu0
        %v877 = vadd.f32 0.0, %v876
        %v878 = vpop.f32.mrb[0].mxu0
        %879 = vmatprep.mubr.f32.mxu0 0.0
        %880 = vmatmul.mubr.f32.gmra.mrb[0].mxu0 %v542
        %v881 = vpop.f32.mrb[0].mxu0
        %v882 = vadd.f32 0.0, %v881
        %v883 = vpop.f32.mrb[0].mxu0
        %884 = vmatprep.mubr.f32.mxu0 0.0
        %885 = vmatmul.mubr.f32.gmra.mrb[0].mxu0 %v545
        %v886 = vpop.f32.mrb[0].mxu0
        %v887 = vadd.f32 0.0, %v886
        %v888 = vpop.f32.mrb[0].mxu0
        %889 = vmatprep.mubr.f32.mxu0 0.0
        %890 = vmatmul.mubr.f32.gmra.mrb[0].mxu0 %v548
        %v891 = vpop.f32.mrb[0].mxu0
        %v892 = vadd.f32 0.0, %v891
        %v893 = vpop.f32.mrb[0].mxu0
        %894 = vmatprep.mubr.f32.mxu0 0.0
        %895 = vmatmul.mubr.f32.gmra.mrb[0].mxu0 %v551
        %v896 = vpop.f32.mrb[0].mxu0
        %v897 = vadd.f32 0.0, %v896
        %v898 = vpop.f32.mrb[0].mxu0
        %899 = vmatprep.mubr.f32.mxu0 0.0
        %900 = vmatmul.mubr.f32.gmra.mrb[0].mxu0 %v554
        %v901 = vpop.f32.mrb[0].mxu0
        %v902 = vadd.f32 0.0, %v901
        %v903 = vpop.f32.mrb[0].mxu0
        %904 = vmatprep.mubr.f32.mxu0 0.0
        %905 = vmatmul.mubr.f32.gmra.mrb[0].mxu0 %v557
        %v906 = vpop.f32.mrb[0].mxu0
        %v907 = vadd.f32 0.0, %v906
        %v908 = vpop.f32.mrb[0].mxu0
        %909 = vmatprep.mubr.f32.mxu0 0.0
        %910 = vmatmul.mubr.f32.gmra.mrb[0].mxu0 %v560
        %v911 = vpop.f32.mrb[0].mxu0
        %v912 = vadd.f32 0.0, %v911
        %v913 = vpop.f32.mrb[0].mxu0
        %914 = vmatprep.mubr.f32.mxu0 0.0
        %915 = vmatmul.mubr.f32.gmra.mrb[0].mxu0 %v563
        %v916 = vpop.f32.mrb[0].mxu0
        %v917 = vadd.f32 0.0, %v916
        %v918 = vpop.f32.mrb[0].mxu0
        %919 = vmatprep.mubr.f32.mxu0 0.0
        %920 = vmatmul.mubr.f32.gmra.mrb[0].mxu0 %v566
        %v921 = vpop.f32.mrb[0].mxu0
        %v922 = vadd.f32 0.0, %v921
        %v923 = vpop.f32.mrb[0].mxu0
        %924 = vmatprep.mubr.f32.mxu0 0.0
        %925 = vmatmul.mubr.f32.gmra.mrb[0].mxu0 %v569
        %v926 = vpop.f32.mrb[0].mxu0
        %v927 = vadd.f32 0.0, %v926
        %v928 = vpop.f32.mrb[0].mxu0
        %929 = vmatprep.mubr.f32.mxu0 0.0
        %930 = vmatmul.mubr.f32.gmra.mrb[0].mxu0 %v572
        %v931 = vpop.f32.mrb[0].mxu0
        %v932 = vadd.f32 0.0, %v931
        %v933 = vpop.f32.mrb[0].mxu0
        %934 = vmatprep.mubr.f32.mxu0 0.0
        %935 = vmatmul.mubr.f32.gmra.mrb[0].mxu0 %v575
        %v936 = vpop.f32.mrb[0].mxu0
        %v937 = vadd.f32 0.0, %v936
        %v938 = vpop.f32.mrb[0].mxu0
        %939 = vmatprep.mubr.f32.mxu0 0.0
        %940 = vmatmul.mubr.f32.gmra.mrb[0].mxu0 %v578
        %v941 = vpop.f32.mrb[0].mxu0
        %v942 = vadd.f32 0.0, %v941
        %v943 = vpop.f32.mrb[0].mxu0
        %944 = vdwg.mxu0
        %v945 = vmul.f32 %v647, 0.0010283801
        %v946 = vmul.f32 %v652, 0.0010283801
        %v947 = vmul.f32 %v657, 0.0010283801
        %v948 = vmul.f32 %v667, 0.0010283801
        %v949 = vmul.f32 %v672, 0.0010283801
        %v950 = vmul.f32 %v677, 0.0010283801
        %v951 = vmul.f32 %v687, 0.0010283801
        %v952 = vmul.f32 %v692, 0.0010283801
        %v953 = vmul.f32 %v697, 0.0010283801
        %v954 = vmul.f32 %v707, 0.0010283801
        %v955 = vmul.f32 %v712, 0.0010283801
        %v956 = vmul.f32 %v717, 0.0010283801
        %v957 = vmul.f32 %v727, 0.0010283801
        %v958 = vmul.f32 %v732, 0.0010283801
        %v959 = vmul.f32 %v737, 0.0010283801
        %v960 = vmul.f32 %v747, 0.0010283801
        %v961 = vmul.f32 %v752, 0.0010283801
        %v962 = vmul.f32 %v757, 0.0010283801
        %v963 = vmul.f32 %v767, 0.0010283801
        %v964 = vmul.f32 %v772, 0.0010283801
        %v965 = vmul.f32 %v777, 0.0010283801
        %v966 = vmul.f32 %v787, 0.0010283801
        %v967 = vmul.f32 %v792, 0.0010283801
        %v968 = vmul.f32 %v797, 0.0010283801
        %v969 = vmul.f32 %v807, 0.0010283801
        %v970 = vmul.f32 %v812, 0.0010283801
        %v971 = vmul.f32 %v817, 0.0010283801
        %v972 = vmul.f32 %v827, 0.0010283801
        %v973 = vmul.f32 %v832, 0.0010283801
        %v974 = vmul.f32 %v837, 0.0010283801
        %v975 = vmul.f32 %v847, 0.0010283801
        %v976 = vmul.f32 %v852, 0.0010283801
        %v977 = vmul.f32 %v857, 0.0010283801
        %v978 = vmul.f32 %v867, 0.0010283801
        %v979 = vmul.f32 %v872, 0.0010283801
        %v980 = vmul.f32 %v877, 0.0010283801
        %v981 = vmul.f32 %v887, 0.0010283801
        %v982 = vmul.f32 %v892, 0.0010283801
        %v983 = vmul.f32 %v897, 0.0010283801
        %v984 = vmul.f32 %v907, 0.0010283801
        %v985 = vmul.f32 %v912, 0.0010283801
        %v986 = vmul.f32 %v917, 0.0010283801
        %v987 = vmul.f32 %v927, 0.0010283801
        %v988 = vmul.f32 %v932, 0.0010283801
        %v989 = vmul.f32 %v937, 0.0010283801
        %v990 = vmul.f32 %v647, 0.007598758
        %v991 = vmul.f32 %v652, 0.007598758
        %v992 = vmul.f32 %v657, 0.007598758
        %v993 = vmul.f32 %v667, 0.007598758
        %v994 = vmul.f32 %v672, 0.007598758
        %v995 = vmul.f32 %v677, 0.007598758
        %v996 = vmul.f32 %v687, 0.007598758
        %v997 = vmul.f32 %v692, 0.007598758
        %v998 = vmul.f32 %v697, 0.007598758
        %v999 = vmul.f32 %v707, 0.007598758
        %v1000 = vmul.f32 %v712, 0.007598758
        %v1001 = vmul.f32 %v717, 0.007598758
        %v1002 = vmul.f32 %v727, 0.007598758
        %v1003 = vmul.f32 %v732, 0.007598758
        %v1004 = vmul.f32 %v737, 0.007598758
        %v1005 = vmul.f32 %v747, 0.007598758
        %v1006 = vmul.f32 %v752, 0.007598758
        %v1007 = vmul.f32 %v757, 0.007598758
        %v1008 = vmul.f32 %v767, 0.007598758
        %v1009 = vmul.f32 %v772, 0.007598758
        %v1010 = vmul.f32 %v777, 0.007598758
        %v1011 = vmul.f32 %v787, 0.007598758
        %v1012 = vmul.f32 %v792, 0.007598758
        %v1013 = vmul.f32 %v797, 0.007598758
        %v1014 = vmul.f32 %v807, 0.007598758
        %v1015 = vmul.f32 %v812, 0.007598758
        %v1016 = vmul.f32 %v817, 0.007598758
        %v1017 = vmul.f32 %v827, 0.007598758
        %v1018 = vmul.f32 %v832, 0.007598758
        %v1019 = vmul.f32 %v837, 0.007598758
        %v1020 = vmul.f32 %v847, 0.007598758
        %v1021 = vmul.f32 %v852, 0.007598758
        %v1022 = vmul.f32 %v857, 0.007598758
        %v1023 = vmul.f32 %v867, 0.007598758
        %v1024 = vmul.f32 %v872, 0.007598758
        %v1025 = vmul.f32 %v877, 0.007598758
        %v1026 = vmul.f32 %v887, 0.007598758
        %v1027 = vmul.f32 %v892, 0.007598758
        %v1028 = vmul.f32 %v897, 0.007598758
        %v1029 = vmul.f32 %v907, 0.007598758
        %v1030 = vmul.f32 %v912, 0.007598758
        %v1031 = vmul.f32 %v917, 0.007598758
        %v1032 = vmul.f32 %v927, 0.007598758
        %v1033 = vmul.f32 %v932, 0.007598758
        %v1034 = vmul.f32 %v937, 0.007598758
        %vm1080 = vcmask 1046528
        %v1081 = vrot.slane %v990, 1
        %v1082 = vrot.slane %v991, 1
        %v1083 = vsel %vm1080, %v1081, %v1082
        %v1084 = vrot.slane %v992, 1
        %v1085 = vsel %vm1080, %v1082, %v1084
        %v1086 = vrot.slane %v993, 1
        %v1087 = vrot.slane %v994, 1
        %v1088 = vsel %vm1080, %v1086, %v1087
        %v1089 = vrot.slane %v995, 1
        %v1090 = vsel %vm1080, %v1087, %v1089
        %v1091 = vrot.slane %v996, 1
        %v1092 = vrot.slane %v997, 1
        %v1093 = vsel %vm1080, %v1091, %v1092
        %v1094 = vrot.slane %v998, 1
        %v1095 = vsel %vm1080, %v1092, %v1094
        %v1096 = vrot.slane %v999, 1
        %v1097 = vrot.slane %v1000, 1
        %v1098 = vsel %vm1080, %v1096, %v1097
        %v1099 = vrot.slane %v1001, 1
        %v1100 = vsel %vm1080, %v1097, %v1099
        %v1101 = vrot.slane %v1002, 1
        %v1102 = vrot.slane %v1003, 1
        %v1103 = vsel %vm1080, %v1101, %v1102
        %v1104 = vrot.slane %v1004, 1
        %v1105 = vsel %vm1080, %v1102, %v1104
        %v1106 = vrot.slane %v1005, 1
        %v1107 = vrot.slane %v1006, 1
        %v1108 = vsel %vm1080, %v1106, %v1107
        %v1109 = vrot.slane %v1007, 1
        %v1110 = vsel %vm1080, %v1107, %v1109
        %v1111 = vrot.slane %v1008, 1
        %v1112 = vrot.slane %v1009, 1
        %v1113 = vsel %vm1080, %v1111, %v1112
        %v1114 = vrot.slane %v1010, 1
        %v1115 = vsel %vm1080, %v1112, %v1114
        %v1116 = vrot.slane %v1011, 1
        %v1117 = vrot.slane %v1012, 1
        %v1118 = vsel %vm1080, %v1116, %v1117
        %v1119 = vrot.slane %v1013, 1
        %v1120 = vsel %vm1080, %v1117, %v1119
        %v1121 = vrot.slane %v1014, 1
        %v1122 = vrot.slane %v1015, 1
        %v1123 = vsel %vm1080, %v1121, %v1122
        %v1124 = vrot.slane %v1016, 1
        %v1125 = vsel %vm1080, %v1122, %v1124
        %v1126 = vrot.slane %v1017, 1
        %v1127 = vrot.slane %v1018, 1
        %v1128 = vsel %vm1080, %v1126, %v1127
        %v1129 = vrot.slane %v1019, 1
        %v1130 = vsel %vm1080, %v1127, %v1129
        %v1131 = vrot.slane %v1020, 1
        %v1132 = vrot.slane %v1021, 1
        %v1133 = vsel %vm1080, %v1131, %v1132
        %v1134 = vrot.slane %v1022, 1
        %v1135 = vsel %vm1080, %v1132, %v1134
        %v1136 = vrot.slane %v1023, 1
        %v1137 = vrot.slane %v1024, 1
        %v1138 = vsel %vm1080, %v1136, %v1137
        %v1139 = vrot.slane %v1025, 1
        %v1140 = vsel %vm1080, %v1137, %v1139
        %v1141 = vrot.slane %v1026, 1
        %v1142 = vrot.slane %v1027, 1
        %v1143 = vsel %vm1080, %v1141, %v1142
        %v1144 = vrot.slane %v1028, 1
        %v1145 = vsel %vm1080, %v1142, %v1144
        %v1146 = vrot.slane %v1029, 1
        %v1147 = vrot.slane %v1030, 1
        %v1148 = vsel %vm1080, %v1146, %v1147
        %v1149 = vrot.slane %v1031, 1
        %v1150 = vsel %vm1080, %v1147, %v1149
        %v1151 = vrot.slane %v1032, 1
        %v1152 = vrot.slane %v1033, 1
        %v1153 = vsel %vm1080, %v1151, %v1152
        %v1154 = vrot.slane %v1034, 1
        %v1155 = vsel %vm1080, %v1152, %v1154
        %v1201 = vadd.f32 %v945, %v1083
        %v1202 = vadd.f32 %v946, %v1085
        %v1203 = vadd.f32 %v947, %v1084
        %v1204 = vadd.f32 %v948, %v1088
        %v1205 = vadd.f32 %v949, %v1090
        %v1206 = vadd.f32 %v950, %v1089
        %v1207 = vadd.f32 %v951, %v1093
        %v1208 = vadd.f32 %v952, %v1095
        %v1209 = vadd.f32 %v953, %v1094
        %v1210 = vadd.f32 %v954, %v1098
        %v1211 = vadd.f32 %v955, %v1100
        %v1212 = vadd.f32 %v956, %v1099
        %v1213 = vadd.f32 %v957, %v1103
        %v1214 = vadd.f32 %v958, %v1105
        %v1215 = vadd.f32 %v959, %v1104
        %v1216 = vadd.f32 %v960, %v1108
        %v1217 = vadd.f32 %v961, %v1110
        %v1218 = vadd.f32 %v962, %v1109
        %v1219 = vadd.f32 %v963, %v1113
        %v1220 = vadd.f32 %v964, %v1115
        %v1221 = vadd.f32 %v965, %v1114
        %v1222 = vadd.f32 %v966, %v1118
        %v1223 = vadd.f32 %v967, %v1120
        %v1224 = vadd.f32 %v968, %v1119
        %v1225 = vadd.f32 %v969, %v1123
        %v1226 = vadd.f32 %v970, %v1125
        %v1227 = vadd.f32 %v971, %v1124
        %v1228 = vadd.f32 %v972, %v1128
        %v1229 = vadd.f32 %v973, %v1130
        %v1230 = vadd.f32 %v974, %v1129
        %v1231 = vadd.f32 %v975, %v1133
        %v1232 = vadd.f32 %v976, %v1135
        %v1233 = vadd.f32 %v977, %v1134
        %v1234 = vadd.f32 %v978, %v1138
        %v1235 = vadd.f32 %v979, %v1140
        %v1236 = vadd.f32 %v980, %v1139
        %v1237 = vadd.f32 %v981, %v1143
        %v1238 = vadd.f32 %v982, %v1145
        %v1239 = vadd.f32 %v983, %v1144
        %v1240 = vadd.f32 %v984, %v1148
        %v1241 = vadd.f32 %v985, %v1150
        %v1242 = vadd.f32 %v986, %v1149
        %v1243 = vadd.f32 %v987, %v1153
        %v1244 = vadd.f32 %v988, %v1155
        %v1245 = vadd.f32 %v989, %v1154
        %v1246 = vmul.f32 %v647, 0.036000773
        %v1247 = vmul.f32 %v652, 0.036000773
        %v1248 = vmul.f32 %v657, 0.036000773
        %v1249 = vmul.f32 %v667, 0.036000773
        %v1250 = vmul.f32 %v672, 0.036000773
        %v1251 = vmul.f32 %v677, 0.036000773
        %v1252 = vmul.f32 %v687, 0.036000773
        %v1253 = vmul.f32 %v692, 0.036000773
        %v1254 = vmul.f32 %v697, 0.036000773
        %v1255 = vmul.f32 %v707, 0.036000773
        %v1256 = vmul.f32 %v712, 0.036000773
        %v1257 = vmul.f32 %v717, 0.036000773
        %v1258 = vmul.f32 %v727, 0.036000773
        %v1259 = vmul.f32 %v732, 0.036000773
        %v1260 = vmul.f32 %v737, 0.036000773
        %v1261 = vmul.f32 %v747, 0.036000773
        %v1262 = vmul.f32 %v752, 0.036000773
        %v1263 = vmul.f32 %v757, 0.036000773
        %v1264 = vmul.f32 %v767, 0.036000773
        %v1265 = vmul.f32 %v772, 0.036000773
        %v1266 = vmul.f32 %v777, 0.036000773
        %v1267 = vmul.f32 %v787, 0.036000773
        %v1268 = vmul.f32 %v792, 0.036000773
        %v1269 = vmul.f32 %v797, 0.036000773
        %v1270 = vmul.f32 %v807, 0.036000773
        %v1271 = vmul.f32 %v812, 0.036000773
        %v1272 = vmul.f32 %v817, 0.036000773
        %v1273 = vmul.f32 %v827, 0.036000773
        %v1274 = vmul.f32 %v832, 0.036000773
        %v1275 = vmul.f32 %v837, 0.036000773
        %v1276 = vmul.f32 %v847, 0.036000773
        %v1277 = vmul.f32 %v852, 0.036000773
        %v1278 = vmul.f32 %v857, 0.036000773
        %v1279 = vmul.f32 %v867, 0.036000773
        %v1280 = vmul.f32 %v872, 0.036000773
        %v1281 = vmul.f32 %v877, 0.036000773
        %v1282 = vmul.f32 %v887, 0.036000773
        %v1283 = vmul.f32 %v892, 0.036000773
        %v1284 = vmul.f32 %v897, 0.036000773
        %v1285 = vmul.f32 %v907, 0.036000773
        %v1286 = vmul.f32 %v912, 0.036000773
        %v1287 = vmul.f32 %v917, 0.036000773
        %v1288 = vmul.f32 %v927, 0.036000773
        %v1289 = vmul.f32 %v932, 0.036000773
        %v1290 = vmul.f32 %v937, 0.036000773
        %vm1336 = vcmask 1045504
        %v1337 = vrot.slane %v1246, 2
        %v1338 = vrot.slane %v1247, 2
        %v1339 = vsel %vm1336, %v1337, %v1338
        %v1340 = vrot.slane %v1248, 2
        %v1341 = vsel %vm1336, %v1338, %v1340
        %v1342 = vrot.slane %v1249, 2
        %v1343 = vrot.slane %v1250, 2
        %v1344 = vsel %vm1336, %v1342, %v1343
        %v1345 = vrot.slane %v1251, 2
        %v1346 = vsel %vm1336, %v1343, %v1345
        %v1347 = vrot.slane %v1252, 2
        %v1348 = vrot.slane %v1253, 2
        %v1349 = vsel %vm1336, %v1347, %v1348
        %v1350 = vrot.slane %v1254, 2
        %v1351 = vsel %vm1336, %v1348, %v1350
        %v1352 = vrot.slane %v1255, 2
        %v1353 = vrot.slane %v1256, 2
        %v1354 = vsel %vm1336, %v1352, %v1353
        %v1355 = vrot.slane %v1257, 2
        %v1356 = vsel %vm1336, %v1353, %v1355
        %v1357 = vrot.slane %v1258, 2
        %v1358 = vrot.slane %v1259, 2
        %v1359 = vsel %vm1336, %v1357, %v1358
        %v1360 = vrot.slane %v1260, 2
        %v1361 = vsel %vm1336, %v1358, %v1360
        %v1362 = vrot.slane %v1261, 2
        %v1363 = vrot.slane %v1262, 2
        %v1364 = vsel %vm1336, %v1362, %v1363
        %v1365 = vrot.slane %v1263, 2
        %v1366 = vsel %vm1336, %v1363, %v1365
        %v1367 = vrot.slane %v1264, 2
        %v1368 = vrot.slane %v1265, 2
        %v1369 = vsel %vm1336, %v1367, %v1368
        %v1370 = vrot.slane %v1266, 2
        %v1371 = vsel %vm1336, %v1368, %v1370
        %v1372 = vrot.slane %v1267, 2
        %v1373 = vrot.slane %v1268, 2
        %v1374 = vsel %vm1336, %v1372, %v1373
        %v1375 = vrot.slane %v1269, 2
        %v1376 = vsel %vm1336, %v1373, %v1375
        %v1377 = vrot.slane %v1270, 2
        %v1378 = vrot.slane %v1271, 2
        %v1379 = vsel %vm1336, %v1377, %v1378
        %v1380 = vrot.slane %v1272, 2
        %v1381 = vsel %vm1336, %v1378, %v1380
        %v1382 = vrot.slane %v1273, 2
        %v1383 = vrot.slane %v1274, 2
        %v1384 = vsel %vm1336, %v1382, %v1383
        %v1385 = vrot.slane %v1275, 2
        %v1386 = vsel %vm1336, %v1383, %v1385
        %v1387 = vrot.slane %v1276, 2
        %v1388 = vrot.slane %v1277, 2
        %v1389 = vsel %vm1336, %v1387, %v1388
        %v1390 = vrot.slane %v1278, 2
        %v1391 = vsel %vm1336, %v1388, %v1390
        %v1392 = vrot.slane %v1279, 2
        %v1393 = vrot.slane %v1280, 2
        %v1394 = vsel %vm1336, %v1392, %v1393
        %v1395 = vrot.slane %v1281, 2
        %v1396 = vsel %vm1336, %v1393, %v1395
        %v1397 = vrot.slane %v1282, 2
        %v1398 = vrot.slane %v1283, 2
        %v1399 = vsel %vm1336, %v1397, %v1398
        %v1400 = vrot.slane %v1284, 2
        %v1401 = vsel %vm1336, %v1398, %v1400
        %v1402 = vrot.slane %v1285, 2
        %v1403 = vrot.slane %v1286, 2
        %v1404 = vsel %vm1336, %v1402, %v1403
        %v1405 = vrot.slane %v1287, 2
        %v1406 = vsel %vm1336, %v1403, %v1405
        %v1407 = vrot.slane %v1288, 2
        %v1408 = vrot.slane %v1289, 2
        %v1409 = vsel %vm1336, %v1407, %v1408
        %v1410 = vrot.slane %v1290, 2
        %v1411 = vsel %vm1336, %v1408, %v1410
        %v1457 = vadd.f32 %v1201, %v1339
        %v1458 = vadd.f32 %v1202, %v1341
        %v1459 = vadd.f32 %v1203, %v1340
        %v1460 = vadd.f32 %v1204, %v1344
        %v1461 = vadd.f32 %v1205, %v1346
        %v1462 = vadd.f32 %v1206, %v1345
        %v1463 = vadd.f32 %v1207, %v1349
        %v1464 = vadd.f32 %v1208, %v1351
        %v1465 = vadd.f32 %v1209, %v1350
        %v1466 = vadd.f32 %v1210, %v1354
        %v1467 = vadd.f32 %v1211, %v1356
        %v1468 = vadd.f32 %v1212, %v1355
        %v1469 = vadd.f32 %v1213, %v1359
        %v1470 = vadd.f32 %v1214, %v1361
        %v1471 = vadd.f32 %v1215, %v1360
        %v1472 = vadd.f32 %v1216, %v1364
        %v1473 = vadd.f32 %v1217, %v1366
        %v1474 = vadd.f32 %v1218, %v1365
        %v1475 = vadd.f32 %v1219, %v1369
        %v1476 = vadd.f32 %v1220, %v1371
        %v1477 = vadd.f32 %v1221, %v1370
        %v1478 = vadd.f32 %v1222, %v1374
        %v1479 = vadd.f32 %v1223, %v1376
        %v1480 = vadd.f32 %v1224, %v1375
        %v1481 = vadd.f32 %v1225, %v1379
        %v1482 = vadd.f32 %v1226, %v1381
        %v1483 = vadd.f32 %v1227, %v1380
        %v1484 = vadd.f32 %v1228, %v1384
        %v1485 = vadd.f32 %v1229, %v1386
        %v1486 = vadd.f32 %v1230, %v1385
        %v1487 = vadd.f32 %v1231, %v1389
        %v1488 = vadd.f32 %v1232, %v1391
        %v1489 = vadd.f32 %v1233, %v1390
        %v1490 = vadd.f32 %v1234, %v1394
        %v1491 = vadd.f32 %v1235, %v1396
        %v1492 = vadd.f32 %v1236, %v1395
        %v1493 = vadd.f32 %v1237, %v1399
        %v1494 = vadd.f32 %v1238, %v1401
        %v1495 = vadd.f32 %v1239, %v1400
        %v1496 = vadd.f32 %v1240, %v1404
        %v1497 = vadd.f32 %v1241, %v1406
        %v1498 = vadd.f32 %v1242, %v1405
        %v1499 = vadd.f32 %v1243, %v1409
        %v1500 = vadd.f32 %v1244, %v1411
        %v1501 = vadd.f32 %v1245, %v1410
        %v1502 = vmul.f32 %v647, 0.10936069
        %v1503 = vmul.f32 %v652, 0.10936069
        %v1504 = vmul.f32 %v657, 0.10936069
        %v1505 = vmul.f32 %v662, 0.10936069
        %v1506 = vmul.f32 %v667, 0.10936069
        %v1507 = vmul.f32 %v672, 0.10936069
        %v1508 = vmul.f32 %v677, 0.10936069
        %v1509 = vmul.f32 %v682, 0.10936069
        %v1510 = vmul.f32 %v687, 0.10936069
        %v1511 = vmul.f32 %v692, 0.10936069
        %v1512 = vmul.f32 %v697, 0.10936069
        %v1513 = vmul.f32 %v702, 0.10936069
        %v1514 = vmul.f32 %v707, 0.10936069
        %v1515 = vmul.f32 %v712, 0.10936069
        %v1516 = vmul.f32 %v717, 0.10936069
        %v1517 = vmul.f32 %v722, 0.10936069
        %v1518 = vmul.f32 %v727, 0.10936069
        %v1519 = vmul.f32 %v732, 0.10936069
        %v1520 = vmul.f32 %v737, 0.10936069
        %v1521 = vmul.f32 %v742, 0.10936069
        %v1522 = vmul.f32 %v747, 0.10936069
        %v1523 = vmul.f32 %v752, 0.10936069
        %v1524 = vmul.f32 %v757, 0.10936069
        %v1525 = vmul.f32 %v762, 0.10936069
        %v1526 = vmul.f32 %v767, 0.10936069
        %v1527 = vmul.f32 %v772, 0.10936069
        %v1528 = vmul.f32 %v777, 0.10936069
        %v1529 = vmul.f32 %v782, 0.10936069
        %v1530 = vmul.f32 %v787, 0.10936069
        %v1531 = vmul.f32 %v792, 0.10936069
        %v1532 = vmul.f32 %v797, 0.10936069
        %v1533 = vmul.f32 %v802, 0.10936069
        %v1534 = vmul.f32 %v807, 0.10936069
        %v1535 = vmul.f32 %v812, 0.10936069
        %v1536 = vmul.f32 %v817, 0.10936069
        %v1537 = vmul.f32 %v822, 0.10936069
        %v1538 = vmul.f32 %v827, 0.10936069
        %v1539 = vmul.f32 %v832, 0.10936069
        %v1540 = vmul.f32 %v837, 0.10936069
        %v1541 = vmul.f32 %v842, 0.10936069
        %v1542 = vmul.f32 %v847, 0.10936069
        %v1543 = vmul.f32 %v852, 0.10936069
        %v1544 = vmul.f32 %v857, 0.10936069
        %v1545 = vmul.f32 %v862, 0.10936069
        %v1546 = vmul.f32 %v867, 0.10936069
        %v1547 = vmul.f32 %v872, 0.10936069
        %v1548 = vmul.f32 %v877, 0.10936069
        %v1549 = vmul.f32 %v882, 0.10936069
        %v1550 = vmul.f32 %v887, 0.10936069
        %v1551 = vmul.f32 %v892, 0.10936069
        %v1552 = vmul.f32 %v897, 0.10936069
        %v1553 = vmul.f32 %v902, 0.10936069
        %v1554 = vmul.f32 %v907, 0.10936069
        %v1555 = vmul.f32 %v912, 0.10936069
        %v1556 = vmul.f32 %v917, 0.10936069
        %v1557 = vmul.f32 %v922, 0.10936069
        %v1558 = vmul.f32 %v927, 0.10936069
        %v1559 = vmul.f32 %v932, 0.10936069
        %v1560 = vmul.f32 %v937, 0.10936069
        %v1561 = vmul.f32 %v942, 0.10936069
        %vm1622 = vcmask 1044480
        %v1623 = vrot.slane %v1502, 3
        %v1624 = vrot.slane %v1503, 3
        %v1625 = vsel %vm1622, %v1623, %v1624
        %v1626 = vrot.slane %v1504, 3
        %v1627 = vsel %vm1622, %v1624, %v1626
        %v1628 = vrot.slane %v1505, 3
        %v1629 = vsel %vm1622, %v1626, %v1628
        %v1630 = vrot.slane %v1506, 3
        %v1631 = vrot.slane %v1507, 3
        %v1632 = vsel %vm1622, %v1630, %v1631
        %v1633 = vrot.slane %v1508, 3
        %v1634 = vsel %vm1622, %v1631, %v1633
        %v1635 = vrot.slane %v1509, 3
        %v1636 = vsel %vm1622, %v1633, %v1635
        %v1637 = vrot.slane %v1510, 3
        %v1638 = vrot.slane %v1511, 3
        %v1639 = vsel %vm1622, %v1637, %v1638
        %v1640 = vrot.slane %v1512, 3
        %v1641 = vsel %vm1622, %v1638, %v1640
        %v1642 = vrot.slane %v1513, 3
        %v1643 = vsel %vm1622, %v1640, %v1642
        %v1644 = vrot.slane %v1514, 3
        %v1645 = vrot.slane %v1515, 3
        %v1646 = vsel %vm1622, %v1644, %v1645
        %v1647 = vrot.slane %v1516, 3
        %v1648 = vsel %vm1622, %v1645, %v1647
        %v1649 = vrot.slane %v1517, 3
        %v1650 = vsel %vm1622, %v1647, %v1649
        %v1651 = vrot.slane %v1518, 3
        %v1652 = vrot.slane %v1519, 3
        %v1653 = vsel %vm1622, %v1651, %v1652
        %v1654 = vrot.slane %v1520, 3
        %v1655 = vsel %vm1622, %v1652, %v1654
        %v1656 = vrot.slane %v1521, 3
        %v1657 = vsel %vm1622, %v1654, %v1656
        %v1658 = vrot.slane %v1522, 3
        %v1659 = vrot.slane %v1523, 3
        %v1660 = vsel %vm1622, %v1658, %v1659
        %v1661 = vrot.slane %v1524, 3
        %v1662 = vsel %vm1622, %v1659, %v1661
        %v1663 = vrot.slane %v1525, 3
        %v1664 = vsel %vm1622, %v1661, %v1663
        %v1665 = vrot.slane %v1526, 3
        %v1666 = vrot.slane %v1527, 3
        %v1667 = vsel %vm1622, %v1665, %v1666
        %v1668 = vrot.slane %v1528, 3
        %v1669 = vsel %vm1622, %v1666, %v1668
        %v1670 = vrot.slane %v1529, 3
        %v1671 = vsel %vm1622, %v1668, %v1670
        %v1672 = vrot.slane %v1530, 3
        %v1673 = vrot.slane %v1531, 3
        %v1674 = vsel %vm1622, %v1672, %v1673
        %v1675 = vrot.slane %v1532, 3
        %v1676 = vsel %vm1622, %v1673, %v1675
        %v1677 = vrot.slane %v1533, 3
        %v1678 = vsel %vm1622, %v1675, %v1677
        %v1679 = vrot.slane %v1534, 3
        %v1680 = vrot.slane %v1535, 3
        %v1681 = vsel %vm1622, %v1679, %v1680
        %v1682 = vrot.slane %v1536, 3
        %v1683 = vsel %vm1622, %v1680, %v1682
        %v1684 = vrot.slane %v1537, 3
        %v1685 = vsel %vm1622, %v1682, %v1684
        %v1686 = vrot.slane %v1538, 3
        %v1687 = vrot.slane %v1539, 3
        %v1688 = vsel %vm1622, %v1686, %v1687
        %v1689 = vrot.slane %v1540, 3
        %v1690 = vsel %vm1622, %v1687, %v1689
        %v1691 = vrot.slane %v1541, 3
        %v1692 = vsel %vm1622, %v1689, %v1691
        %v1693 = vrot.slane %v1542, 3
        %v1694 = vrot.slane %v1543, 3
        %v1695 = vsel %vm1622, %v1693, %v1694
        %v1696 = vrot.slane %v1544, 3
        %v1697 = vsel %vm1622, %v1694, %v1696
        %v1698 = vrot.slane %v1545, 3
        %v1699 = vsel %vm1622, %v1696, %v1698
        %v1700 = vrot.slane %v1546, 3
        %v1701 = vrot.slane %v1547, 3
        %v1702 = vsel %vm1622, %v1700, %v1701
        %v1703 = vrot.slane %v1548, 3
        %v1704 = vsel %vm1622, %v1701, %v1703
        %v1705 = vrot.slane %v1549, 3
        %v1706 = vsel %vm1622, %v1703, %v1705
        %v1707 = vrot.slane %v1550, 3
        %v1708 = vrot.slane %v1551, 3
        %v1709 = vsel %vm1622, %v1707, %v1708
        %v1710 = vrot.slane %v1552, 3
        %v1711 = vsel %vm1622, %v1708, %v1710
        %v1712 = vrot.slane %v1553, 3
        %v1713 = vsel %vm1622, %v1710, %v1712
        %v1714 = vrot.slane %v1554, 3
        %v1715 = vrot.slane %v1555, 3
        %v1716 = vsel %vm1622, %v1714, %v1715
        %v1717 = vrot.slane %v1556, 3
        %v1718 = vsel %vm1622, %v1715, %v1717
        %v1719 = vrot.slane %v1557, 3
        %v1720 = vsel %vm1622, %v1717, %v1719
        %v1721 = vrot.slane %v1558, 3
        %v1722 = vrot.slane %v1559, 3
        %v1723 = vsel %vm1622, %v1721, %v1722
        %v1724 = vrot.slane %v1560, 3
        %v1725 = vsel %vm1622, %v1722, %v1724
        %v1726 = vrot.slane %v1561, 3
        %v1727 = vsel %vm1622, %v1724, %v1726
        %v1773 = vadd.f32 %v1457, %v1625
        %v1774 = vadd.f32 %v1458, %v1627
        %v1775 = vadd.f32 %v1459, %v1629
        %v1776 = vadd.f32 %v1460, %v1632
        %v1777 = vadd.f32 %v1461, %v1634
        %v1778 = vadd.f32 %v1462, %v1636
        %v1779 = vadd.f32 %v1463, %v1639
        %v1780 = vadd.f32 %v1464, %v1641
        %v1781 = vadd.f32 %v1465, %v1643
        %v1782 = vadd.f32 %v1466, %v1646
        %v1783 = vadd.f32 %v1467, %v1648
        %v1784 = vadd.f32 %v1468, %v1650
        %v1785 = vadd.f32 %v1469, %v1653
        %v1786 = vadd.f32 %v1470, %v1655
        %v1787 = vadd.f32 %v1471, %v1657
        %v1788 = vadd.f32 %v1472, %v1660
        %v1789 = vadd.f32 %v1473, %v1662
        %v1790 = vadd.f32 %v1474, %v1664
        %v1791 = vadd.f32 %v1475, %v1667
        %v1792 = vadd.f32 %v1476, %v1669
        %v1793 = vadd.f32 %v1477, %v1671
        %v1794 = vadd.f32 %v1478, %v1674
        %v1795 = vadd.f32 %v1479, %v1676
        %v1796 = vadd.f32 %v1480, %v1678
        %v1797 = vadd.f32 %v1481, %v1681
        %v1798 = vadd.f32 %v1482, %v1683
        %v1799 = vadd.f32 %v1483, %v1685
        %v1800 = vadd.f32 %v1484, %v1688
        %v1801 = vadd.f32 %v1485, %v1690
        %v1802 = vadd.f32 %v1486, %v1692
        %v1803 = vadd.f32 %v1487, %v1695
        %v1804 = vadd.f32 %v1488, %v1697
        %v1805 = vadd.f32 %v1489, %v1699
        %v1806 = vadd.f32 %v1490, %v1702
        %v1807 = vadd.f32 %v1491, %v1704
        %v1808 = vadd.f32 %v1492, %v1706
        %v1809 = vadd.f32 %v1493, %v1709
        %v1810 = vadd.f32 %v1494, %v1711
        %v1811 = vadd.f32 %v1495, %v1713
        %v1812 = vadd.f32 %v1496, %v1716
        %v1813 = vadd.f32 %v1497, %v1718
        %v1814 = vadd.f32 %v1498, %v1720
        %v1815 = vadd.f32 %v1499, %v1723
        %v1816 = vadd.f32 %v1500, %v1725
        %v1817 = vadd.f32 %v1501, %v1727
        %v1818 = vmul.f32 %v647, 0.21300554
        %v1819 = vmul.f32 %v652, 0.21300554
        %v1820 = vmul.f32 %v657, 0.21300554
        %v1821 = vmul.f32 %v662, 0.21300554
        %v1822 = vmul.f32 %v667, 0.21300554
        %v1823 = vmul.f32 %v672, 0.21300554
        %v1824 = vmul.f32 %v677, 0.21300554
        %v1825 = vmul.f32 %v682, 0.21300554
        %v1826 = vmul.f32 %v687, 0.21300554
        %v1827 = vmul.f32 %v692, 0.21300554
        %v1828 = vmul.f32 %v697, 0.21300554
        %v1829 = vmul.f32 %v702, 0.21300554
        %v1830 = vmul.f32 %v707, 0.21300554
        %v1831 = vmul.f32 %v712, 0.21300554
        %v1832 = vmul.f32 %v717, 0.21300554
        %v1833 = vmul.f32 %v722, 0.21300554
        %v1834 = vmul.f32 %v727, 0.21300554
        %v1835 = vmul.f32 %v732, 0.21300554
        %v1836 = vmul.f32 %v737, 0.21300554
        %v1837 = vmul.f32 %v742, 0.21300554
        %v1838 = vmul.f32 %v747, 0.21300554
        %v1839 = vmul.f32 %v752, 0.21300554
        %v1840 = vmul.f32 %v757, 0.21300554
        %v1841 = vmul.f32 %v762, 0.21300554
        %v1842 = vmul.f32 %v767, 0.21300554
        %v1843 = vmul.f32 %v772, 0.21300554
        %v1844 = vmul.f32 %v777, 0.21300554
        %v1845 = vmul.f32 %v782, 0.21300554
        %v1846 = vmul.f32 %v787, 0.21300554
        %v1847 = vmul.f32 %v792, 0.21300554
        %v1848 = vmul.f32 %v797, 0.21300554
        %v1849 = vmul.f32 %v802, 0.21300554
        %v1850 = vmul.f32 %v807, 0.21300554
        %v1851 = vmul.f32 %v812, 0.21300554
        %v1852 = vmul.f32 %v817, 0.21300554
        %v1853 = vmul.f32 %v822, 0.21300554
        %v1854 = vmul.f32 %v827, 0.21300554
        %v1855 = vmul.f32 %v832, 0.21300554
        %v1856 = vmul.f32 %v837, 0.21300554
        %v1857 = vmul.f32 %v842, 0.21300554
        %v1858 = vmul.f32 %v847, 0.21300554
        %v1859 = vmul.f32 %v852, 0.21300554
        %v1860 = vmul.f32 %v857, 0.21300554
        %v1861 = vmul.f32 %v862, 0.21300554
        %v1862 = vmul.f32 %v867, 0.21300554
        %v1863 = vmul.f32 %v872, 0.21300554
        %v1864 = vmul.f32 %v877, 0.21300554
        %v1865 = vmul.f32 %v882, 0.21300554
        %v1866 = vmul.f32 %v887, 0.21300554
        %v1867 = vmul.f32 %v892, 0.21300554
        %v1868 = vmul.f32 %v897, 0.21300554
        %v1869 = vmul.f32 %v902, 0.21300554
        %v1870 = vmul.f32 %v907, 0.21300554
        %v1871 = vmul.f32 %v912, 0.21300554
        %v1872 = vmul.f32 %v917, 0.21300554
        %v1873 = vmul.f32 %v922, 0.21300554
        %v1874 = vmul.f32 %v927, 0.21300554
        %v1875 = vmul.f32 %v932, 0.21300554
        %v1876 = vmul.f32 %v937, 0.21300554
        %v1877 = vmul.f32 %v942, 0.21300554
        %vm1938 = vcmask 1043456
        %v1939 = vrot.slane %v1818, 4
        %v1940 = vrot.slane %v1819, 4
        %v1941 = vsel %vm1938, %v1939, %v1940
        %v1942 = vrot.slane %v1820, 4
        %v1943 = vsel %vm1938, %v1940, %v1942
        %v1944 = vrot.slane %v1821, 4
        %v1945 = vsel %vm1938, %v1942, %v1944
        %v1946 = vrot.slane %v1822, 4
        %v1947 = vrot.slane %v1823, 4
        %v1948 = vsel %vm1938, %v1946, %v1947
        %v1949 = vrot.slane %v1824, 4
        %v1950 = vsel %vm1938, %v1947, %v1949
        %v1951 = vrot.slane %v1825, 4
        %v1952 = vsel %vm1938, %v1949, %v1951
        %v1953 = vrot.slane %v1826, 4
        %v1954 = vrot.slane %v1827, 4
        %v1955 = vsel %vm1938, %v1953, %v1954
        %v1956 = vrot.slane %v1828, 4
        %v1957 = vsel %vm1938, %v1954, %v1956
        %v1958 = vrot.slane %v1829, 4
        %v1959 = vsel %vm1938, %v1956, %v1958
        %v1960 = vrot.slane %v1830, 4
        %v1961 = vrot.slane %v1831, 4
        %v1962 = vsel %vm1938, %v1960, %v1961
        %v1963 = vrot.slane %v1832, 4
        %v1964 = vsel %vm1938, %v1961, %v1963
        %v1965 = vrot.slane %v1833, 4
        %v1966 = vsel %vm1938, %v1963, %v1965
        %v1967 = vrot.slane %v1834, 4
        %v1968 = vrot.slane %v1835, 4
        %v1969 = vsel %vm1938, %v1967, %v1968
        %v1970 = vrot.slane %v1836, 4
        %v1971 = vsel %vm1938, %v1968, %v1970
        %v1972 = vrot.slane %v1837, 4
        %v1973 = vsel %vm1938, %v1970, %v1972
        %v1974 = vrot.slane %v1838, 4
        %v1975 = vrot.slane %v1839, 4
        %v1976 = vsel %vm1938, %v1974, %v1975
        %v1977 = vrot.slane %v1840, 4
        %v1978 = vsel %vm1938, %v1975, %v1977
        %v1979 = vrot.slane %v1841, 4
        %v1980 = vsel %vm1938, %v1977, %v1979
        %v1981 = vrot.slane %v1842, 4
        %v1982 = vrot.slane %v1843, 4
        %v1983 = vsel %vm1938, %v1981, %v1982
        %v1984 = vrot.slane %v1844, 4
        %v1985 = vsel %vm1938, %v1982, %v1984
        %v1986 = vrot.slane %v1845, 4
        %v1987 = vsel %vm1938, %v1984, %v1986
        %v1988 = vrot.slane %v1846, 4
        %v1989 = vrot.slane %v1847, 4
        %v1990 = vsel %vm1938, %v1988, %v1989
        %v1991 = vrot.slane %v1848, 4
        %v1992 = vsel %vm1938, %v1989, %v1991
        %v1993 = vrot.slane %v1849, 4
        %v1994 = vsel %vm1938, %v1991, %v1993
        %v1995 = vrot.slane %v1850, 4
        %v1996 = vrot.slane %v1851, 4
        %v1997 = vsel %vm1938, %v1995, %v1996
        %v1998 = vrot.slane %v1852, 4
        %v1999 = vsel %vm1938, %v1996, %v1998
        %v2000 = vrot.slane %v1853, 4
        %v2001 = vsel %vm1938, %v1998, %v2000
        %v2002 = vrot.slane %v1854, 4
        %v2003 = vrot.slane %v1855, 4
        %v2004 = vsel %vm1938, %v2002, %v2003
        %v2005 = vrot.slane %v1856, 4
        %v2006 = vsel %vm1938, %v2003, %v2005
        %v2007 = vrot.slane %v1857, 4
        %v2008 = vsel %vm1938, %v2005, %v2007
        %v2009 = vrot.slane %v1858, 4
        %v2010 = vrot.slane %v1859, 4
        %v2011 = vsel %vm1938, %v2009, %v2010
        %v2012 = vrot.slane %v1860, 4
        %v2013 = vsel %vm1938, %v2010, %v2012
        %v2014 = vrot.slane %v1861, 4
        %v2015 = vsel %vm1938, %v2012, %v2014
        %v2016 = vrot.slane %v1862, 4
        %v2017 = vrot.slane %v1863, 4
        %v2018 = vsel %vm1938, %v2016, %v2017
        %v2019 = vrot.slane %v1864, 4
        %v2020 = vsel %vm1938, %v2017, %v2019
        %v2021 = vrot.slane %v1865, 4
        %v2022 = vsel %vm1938, %v2019, %v2021
        %v2023 = vrot.slane %v1866, 4
        %v2024 = vrot.slane %v1867, 4
        %v2025 = vsel %vm1938, %v2023, %v2024
        %v2026 = vrot.slane %v1868, 4
        %v2027 = vsel %vm1938, %v2024, %v2026
        %v2028 = vrot.slane %v1869, 4
        %v2029 = vsel %vm1938, %v2026, %v2028
        %v2030 = vrot.slane %v1870, 4
        %v2031 = vrot.slane %v1871, 4
        %v2032 = vsel %vm1938, %v2030, %v2031
        %v2033 = vrot.slane %v1872, 4
        %v2034 = vsel %vm1938, %v2031, %v2033
        %v2035 = vrot.slane %v1873, 4
        %v2036 = vsel %vm1938, %v2033, %v2035
        %v2037 = vrot.slane %v1874, 4
        %v2038 = vrot.slane %v1875, 4
        %v2039 = vsel %vm1938, %v2037, %v2038
        %v2040 = vrot.slane %v1876, 4
        %v2041 = vsel %vm1938, %v2038, %v2040
        %v2042 = vrot.slane %v1877, 4
        %v2043 = vsel %vm1938, %v2040, %v2042
        %v2089 = vadd.f32 %v1773, %v1941
        %v2090 = vadd.f32 %v1774, %v1943
        %v2091 = vadd.f32 %v1775, %v1945
        %v2092 = vadd.f32 %v1776, %v1948
        %v2093 = vadd.f32 %v1777, %v1950
        %v2094 = vadd.f32 %v1778, %v1952
        %v2095 = vadd.f32 %v1779, %v1955
        %v2096 = vadd.f32 %v1780, %v1957
        %v2097 = vadd.f32 %v1781, %v1959
        %v2098 = vadd.f32 %v1782, %v1962
        %v2099 = vadd.f32 %v1783, %v1964
        %v2100 = vadd.f32 %v1784, %v1966
        %v2101 = vadd.f32 %v1785, %v1969
        %v2102 = vadd.f32 %v1786, %v1971
        %v2103 = vadd.f32 %v1787, %v1973
        %v2104 = vadd.f32 %v1788, %v1976
        %v2105 = vadd.f32 %v1789, %v1978
        %v2106 = vadd.f32 %v1790, %v1980
        %v2107 = vadd.f32 %v1791, %v1983
        %v2108 = vadd.f32 %v1792, %v1985
        %v2109 = vadd.f32 %v1793, %v1987
        %v2110 = vadd.f32 %v1794, %v1990
        %v2111 = vadd.f32 %v1795, %v1992
        %v2112 = vadd.f32 %v1796, %v1994
        %v2113 = vadd.f32 %v1797, %v1997
        %v2114 = vadd.f32 %v1798, %v1999
        %v2115 = vadd.f32 %v1799, %v2001
        %v2116 = vadd.f32 %v1800, %v2004
        %v2117 = vadd.f32 %v1801, %v2006
        %v2118 = vadd.f32 %v1802, %v2008
        %v2119 = vadd.f32 %v1803, %v2011
        %v2120 = vadd.f32 %v1804, %v2013
        %v2121 = vadd.f32 %v1805, %v2015
        %v2122 = vadd.f32 %v1806, %v2018
        %v2123 = vadd.f32 %v1807, %v2020
        %v2124 = vadd.f32 %v1808, %v2022
        %v2125 = vadd.f32 %v1809, %v2025
        %v2126 = vadd.f32 %v1810, %v2027
        %v2127 = vadd.f32 %v1811, %v2029
        %v2128 = vadd.f32 %v1812, %v2032
        %v2129 = vadd.f32 %v1813, %v2034
        %v2130 = vadd.f32 %v1814, %v2036
        %v2131 = vadd.f32 %v1815, %v2039
        %v2132 = vadd.f32 %v1816, %v2041
        %v2133 = vadd.f32 %v1817, %v2043
        %v2134 = vmul.f32 %v647, 0.26601171
        %v2135 = vmul.f32 %v652, 0.26601171
        %v2136 = vmul.f32 %v657, 0.26601171
        %v2137 = vmul.f32 %v662, 0.26601171
        %v2138 = vmul.f32 %v667, 0.26601171
        %v2139 = vmul.f32 %v672, 0.26601171
        %v2140 = vmul.f32 %v677, 0.26601171
        %v2141 = vmul.f32 %v682, 0.26601171
        %v2142 = vmul.f32 %v687, 0.26601171
        %v2143 = vmul.f32 %v692, 0.26601171
        %v2144 = vmul.f32 %v697, 0.26601171
        %v2145 = vmul.f32 %v702, 0.26601171
        %v2146 = vmul.f32 %v707, 0.26601171
        %v2147 = vmul.f32 %v712, 0.26601171
        %v2148 = vmul.f32 %v717, 0.26601171
        %v2149 = vmul.f32 %v722, 0.26601171
        %v2150 = vmul.f32 %v727, 0.26601171
        %v2151 = vmul.f32 %v732, 0.26601171
        %v2152 = vmul.f32 %v737, 0.26601171
        %v2153 = vmul.f32 %v742, 0.26601171
        %v2154 = vmul.f32 %v747, 0.26601171
        %v2155 = vmul.f32 %v752, 0.26601171
        %v2156 = vmul.f32 %v757, 0.26601171
        %v2157 = vmul.f32 %v762, 0.26601171
        %v2158 = vmul.f32 %v767, 0.26601171
        %v2159 = vmul.f32 %v772, 0.26601171
        %v2160 = vmul.f32 %v777, 0.26601171
        %v2161 = vmul.f32 %v782, 0.26601171
        %v2162 = vmul.f32 %v787, 0.26601171
        %v2163 = vmul.f32 %v792, 0.26601171
        %v2164 = vmul.f32 %v797, 0.26601171
        %v2165 = vmul.f32 %v802, 0.26601171
        %v2166 = vmul.f32 %v807, 0.26601171
        %v2167 = vmul.f32 %v812, 0.26601171
        %v2168 = vmul.f32 %v817, 0.26601171
        %v2169 = vmul.f32 %v822, 0.26601171
        %v2170 = vmul.f32 %v827, 0.26601171
        %v2171 = vmul.f32 %v832, 0.26601171
        %v2172 = vmul.f32 %v837, 0.26601171
        %v2173 = vmul.f32 %v842, 0.26601171
        %v2174 = vmul.f32 %v847, 0.26601171
        %v2175 = vmul.f32 %v852, 0.26601171
        %v2176 = vmul.f32 %v857, 0.26601171
        %v2177 = vmul.f32 %v862, 0.26601171
        %v2178 = vmul.f32 %v867, 0.26601171
        %v2179 = vmul.f32 %v872, 0.26601171
        %v2180 = vmul.f32 %v877, 0.26601171
        %v2181 = vmul.f32 %v882, 0.26601171
        %v2182 = vmul.f32 %v887, 0.26601171
        %v2183 = vmul.f32 %v892, 0.26601171
        %v2184 = vmul.f32 %v897, 0.26601171
        %v2185 = vmul.f32 %v902, 0.26601171
        %v2186 = vmul.f32 %v907, 0.26601171
        %v2187 = vmul.f32 %v912, 0.26601171
        %v2188 = vmul.f32 %v917, 0.26601171
        %v2189 = vmul.f32 %v922, 0.26601171
        %v2190 = vmul.f32 %v927, 0.26601171
        %v2191 = vmul.f32 %v932, 0.26601171
        %v2192 = vmul.f32 %v937, 0.26601171
        %v2193 = vmul.f32 %v942, 0.26601171
        %vm2254 = vcmask 1042432
        %v2255 = vrot.slane %v2134, 5
        %v2256 = vrot.slane %v2135, 5
        %v2257 = vsel %vm2254, %v2255, %v2256
        %v2258 = vrot.slane %v2136, 5
        %v2259 = vsel %vm2254, %v2256, %v2258
        %v2260 = vrot.slane %v2137, 5
        %v2261 = vsel %vm2254, %v2258, %v2260
        %v2262 = vrot.slane %v2138, 5
        %v2263 = vrot.slane %v2139, 5
        %v2264 = vsel %vm2254, %v2262, %v2263
        %v2265 = vrot.slane %v2140, 5
        %v2266 = vsel %vm2254, %v2263, %v2265
        %v2267 = vrot.slane %v2141, 5
        %v2268 = vsel %vm2254, %v2265, %v2267
        %v2269 = vrot.slane %v2142, 5
        %v2270 = vrot.slane %v2143, 5
        %v2271 = vsel %vm2254, %v2269, %v2270
        %v2272 = vrot.slane %v2144, 5
        %v2273 = vsel %vm2254, %v2270, %v2272
        %v2274 = vrot.slane %v2145, 5
        %v2275 = vsel %vm2254, %v2272, %v2274
        %v2276 = vrot.slane %v2146, 5
        %v2277 = vrot.slane %v2147, 5
        %v2278 = vsel %vm2254, %v2276, %v2277
        %v2279 = vrot.slane %v2148, 5
        %v2280 = vsel %vm2254, %v2277, %v2279
        %v2281 = vrot.slane %v2149, 5
        %v2282 = vsel %vm2254, %v2279, %v2281
        %v2283 = vrot.slane %v2150, 5
        %v2284 = vrot.slane %v2151, 5
        %v2285 = vsel %vm2254, %v2283, %v2284
        %v2286 = vrot.slane %v2152, 5
        %v2287 = vsel %vm2254, %v2284, %v2286
        %v2288 = vrot.slane %v2153, 5
        %v2289 = vsel %vm2254, %v2286, %v2288
        %v2290 = vrot.slane %v2154, 5
        %v2291 = vrot.slane %v2155, 5
        %v2292 = vsel %vm2254, %v2290, %v2291
        %v2293 = vrot.slane %v2156, 5
        %v2294 = vsel %vm2254, %v2291, %v2293
        %v2295 = vrot.slane %v2157, 5
        %v2296 = vsel %vm2254, %v2293, %v2295
        %v2297 = vrot.slane %v2158, 5
        %v2298 = vrot.slane %v2159, 5
        %v2299 = vsel %vm2254, %v2297, %v2298
        %v2300 = vrot.slane %v2160, 5
        %v2301 = vsel %vm2254, %v2298, %v2300
        %v2302 = vrot.slane %v2161, 5
        %v2303 = vsel %vm2254, %v2300, %v2302
        %v2304 = vrot.slane %v2162, 5
        %v2305 = vrot.slane %v2163, 5
        %v2306 = vsel %vm2254, %v2304, %v2305
        %v2307 = vrot.slane %v2164, 5
        %v2308 = vsel %vm2254, %v2305, %v2307
        %v2309 = vrot.slane %v2165, 5
        %v2310 = vsel %vm2254, %v2307, %v2309
        %v2311 = vrot.slane %v2166, 5
        %v2312 = vrot.slane %v2167, 5
        %v2313 = vsel %vm2254, %v2311, %v2312
        %v2314 = vrot.slane %v2168, 5
        %v2315 = vsel %vm2254, %v2312, %v2314
        %v2316 = vrot.slane %v2169, 5
        %v2317 = vsel %vm2254, %v2314, %v2316
        %v2318 = vrot.slane %v2170, 5
        %v2319 = vrot.slane %v2171, 5
        %v2320 = vsel %vm2254, %v2318, %v2319
        %v2321 = vrot.slane %v2172, 5
        %v2322 = vsel %vm2254, %v2319, %v2321
        %v2323 = vrot.slane %v2173, 5
        %v2324 = vsel %vm2254, %v2321, %v2323
        %v2325 = vrot.slane %v2174, 5
        %v2326 = vrot.slane %v2175, 5
        %v2327 = vsel %vm2254, %v2325, %v2326
        %v2328 = vrot.slane %v2176, 5
        %v2329 = vsel %vm2254, %v2326, %v2328
        %v2330 = vrot.slane %v2177, 5
        %v2331 = vsel %vm2254, %v2328, %v2330
        %v2332 = vrot.slane %v2178, 5
        %v2333 = vrot.slane %v2179, 5
        %v2334 = vsel %vm2254, %v2332, %v2333
        %v2335 = vrot.slane %v2180, 5
        %v2336 = vsel %vm2254, %v2333, %v2335
        %v2337 = vrot.slane %v2181, 5
        %v2338 = vsel %vm2254, %v2335, %v2337
        %v2339 = vrot.slane %v2182, 5
        %v2340 = vrot.slane %v2183, 5
        %v2341 = vsel %vm2254, %v2339, %v2340
        %v2342 = vrot.slane %v2184, 5
        %v2343 = vsel %vm2254, %v2340, %v2342
        %v2344 = vrot.slane %v2185, 5
        %v2345 = vsel %vm2254, %v2342, %v2344
        %v2346 = vrot.slane %v2186, 5
        %v2347 = vrot.slane %v2187, 5
        %v2348 = vsel %vm2254, %v2346, %v2347
        %v2349 = vrot.slane %v2188, 5
        %v2350 = vsel %vm2254, %v2347, %v2349
        %v2351 = vrot.slane %v2189, 5
        %v2352 = vsel %vm2254, %v2349, %v2351
        %v2353 = vrot.slane %v2190, 5
        %v2354 = vrot.slane %v2191, 5
        %v2355 = vsel %vm2254, %v2353, %v2354
        %v2356 = vrot.slane %v2192, 5
        %v2357 = vsel %vm2254, %v2354, %v2356
        %v2358 = vrot.slane %v2193, 5
        %v2359 = vsel %vm2254, %v2356, %v2358
        %v2405 = vadd.f32 %v2089, %v2257
        %v2406 = vadd.f32 %v2090, %v2259
        %v2407 = vadd.f32 %v2091, %v2261
        %v2408 = vadd.f32 %v2092, %v2264
        %v2409 = vadd.f32 %v2093, %v2266
        %v2410 = vadd.f32 %v2094, %v2268
        %v2411 = vadd.f32 %v2095, %v2271
        %v2412 = vadd.f32 %v2096, %v2273
        %v2413 = vadd.f32 %v2097, %v2275
        %v2414 = vadd.f32 %v2098, %v2278
        %v2415 = vadd.f32 %v2099, %v2280
        %v2416 = vadd.f32 %v2100, %v2282
        %v2417 = vadd.f32 %v2101, %v2285
        %v2418 = vadd.f32 %v2102, %v2287
        %v2419 = vadd.f32 %v2103, %v2289
        %v2420 = vadd.f32 %v2104, %v2292
        %v2421 = vadd.f32 %v2105, %v2294
        %v2422 = vadd.f32 %v2106, %v2296
        %v2423 = vadd.f32 %v2107, %v2299
        %v2424 = vadd.f32 %v2108, %v2301
        %v2425 = vadd.f32 %v2109, %v2303
        %v2426 = vadd.f32 %v2110, %v2306
        %v2427 = vadd.f32 %v2111, %v2308
        %v2428 = vadd.f32 %v2112, %v2310
        %v2429 = vadd.f32 %v2113, %v2313
        %v2430 = vadd.f32 %v2114, %v2315
        %v2431 = vadd.f32 %v2115, %v2317
        %v2432 = vadd.f32 %v2116, %v2320
        %v2433 = vadd.f32 %v2117, %v2322
        %v2434 = vadd.f32 %v2118, %v2324
        %v2435 = vadd.f32 %v2119, %v2327
        %v2436 = vadd.f32 %v2120, %v2329
        %v2437 = vadd.f32 %v2121, %v2331
        %v2438 = vadd.f32 %v2122, %v2334
        %v2439 = vadd.f32 %v2123, %v2336
        %v2440 = vadd.f32 %v2124, %v2338
        %v2441 = vadd.f32 %v2125, %v2341
        %v2442 = vadd.f32 %v2126, %v2343
        %v2443 = vadd.f32 %v2127, %v2345
        %v2444 = vadd.f32 %v2128, %v2348
        %v2445 = vadd.f32 %v2129, %v2350
        %v2446 = vadd.f32 %v2130, %v2352
        %v2447 = vadd.f32 %v2131, %v2355
        %v2448 = vadd.f32 %v2132, %v2357
        %v2449 = vadd.f32 %v2133, %v2359
        %vm2450 = vcmask 1041408
        %v2451 = vrot.slane %v1818, 6
        %v2452 = vrot.slane %v1819, 6
        %v2453 = vsel %vm2450, %v2451, %v2452
        %v2454 = vrot.slane %v1820, 6
        %v2455 = vsel %vm2450, %v2452, %v2454
        %v2456 = vrot.slane %v1821, 6
        %v2457 = vsel %vm2450, %v2454, %v2456
        %v2458 = vrot.slane %v1822, 6
        %v2459 = vrot.slane %v1823, 6
        %v2460 = vsel %vm2450, %v2458, %v2459
        %v2461 = vrot.slane %v1824, 6
        %v2462 = vsel %vm2450, %v2459, %v2461
        %v2463 = vrot.slane %v1825, 6
        %v2464 = vsel %vm2450, %v2461, %v2463
        %v2465 = vrot.slane %v1826, 6
        %v2466 = vrot.slane %v1827, 6
        %v2467 = vsel %vm2450, %v2465, %v2466
        %v2468 = vrot.slane %v1828, 6
        %v2469 = vsel %vm2450, %v2466, %v2468
        %v2470 = vrot.slane %v1829, 6
        %v2471 = vsel %vm2450, %v2468, %v2470
        %v2472 = vrot.slane %v1830, 6
        %v2473 = vrot.slane %v1831, 6
        %v2474 = vsel %vm2450, %v2472, %v2473
        %v2475 = vrot.slane %v1832, 6
        %v2476 = vsel %vm2450, %v2473, %v2475
        %v2477 = vrot.slane %v1833, 6
        %v2478 = vsel %vm2450, %v2475, %v2477
        %v2479 = vrot.slane %v1834, 6
        %v2480 = vrot.slane %v1835, 6
        %v2481 = vsel %vm2450, %v2479, %v2480
        %v2482 = vrot.slane %v1836, 6
        %v2483 = vsel %vm2450, %v2480, %v2482
        %v2484 = vrot.slane %v1837, 6
        %v2485 = vsel %vm2450, %v2482, %v2484
        %v2486 = vrot.slane %v1838, 6
        %v2487 = vrot.slane %v1839, 6
        %v2488 = vsel %vm2450, %v2486, %v2487
        %v2489 = vrot.slane %v1840, 6
        %v2490 = vsel %vm2450, %v2487, %v2489
        %v2491 = vrot.slane %v1841, 6
        %v2492 = vsel %vm2450, %v2489, %v2491
        %v2493 = vrot.slane %v1842, 6
        %v2494 = vrot.slane %v1843, 6
        %v2495 = vsel %vm2450, %v2493, %v2494
        %v2496 = vrot.slane %v1844, 6
        %v2497 = vsel %vm2450, %v2494, %v2496
        %v2498 = vrot.slane %v1845, 6
        %v2499 = vsel %vm2450, %v2496, %v2498
        %v2500 = vrot.slane %v1846, 6
        %v2501 = vrot.slane %v1847, 6
        %v2502 = vsel %vm2450, %v2500, %v2501
        %v2503 = vrot.slane %v1848, 6
        %v2504 = vsel %vm2450, %v2501, %v2503
        %v2505 = vrot.slane %v1849, 6
        %v2506 = vsel %vm2450, %v2503, %v2505
        %v2507 = vrot.slane %v1850, 6
        %v2508 = vrot.slane %v1851, 6
        %v2509 = vsel %vm2450, %v2507, %v2508
        %v2510 = vrot.slane %v1852, 6
        %v2511 = vsel %vm2450, %v2508, %v2510
        %v2512 = vrot.slane %v1853, 6
        %v2513 = vsel %vm2450, %v2510, %v2512
        %v2514 = vrot.slane %v1854, 6
        %v2515 = vrot.slane %v1855, 6
        %v2516 = vsel %vm2450, %v2514, %v2515
        %v2517 = vrot.slane %v1856, 6
        %v2518 = vsel %vm2450, %v2515, %v2517
        %v2519 = vrot.slane %v1857, 6
        %v2520 = vsel %vm2450, %v2517, %v2519
        %v2521 = vrot.slane %v1858, 6
        %v2522 = vrot.slane %v1859, 6
        %v2523 = vsel %vm2450, %v2521, %v2522
        %v2524 = vrot.slane %v1860, 6
        %v2525 = vsel %vm2450, %v2522, %v2524
        %v2526 = vrot.slane %v1861, 6
        %v2527 = vsel %vm2450, %v2524, %v2526
        %v2528 = vrot.slane %v1862, 6
        %v2529 = vrot.slane %v1863, 6
        %v2530 = vsel %vm2450, %v2528, %v2529
        %v2531 = vrot.slane %v1864, 6
        %v2532 = vsel %vm2450, %v2529, %v2531
        %v2533 = vrot.slane %v1865, 6
        %v2534 = vsel %vm2450, %v2531, %v2533
        %v2535 = vrot.slane %v1866, 6
        %v2536 = vrot.slane %v1867, 6
        %v2537 = vsel %vm2450, %v2535, %v2536
        %v2538 = vrot.slane %v1868, 6
        %v2539 = vsel %vm2450, %v2536, %v2538
        %v2540 = vrot.slane %v1869, 6
        %v2541 = vsel %vm2450, %v2538, %v2540
        %v2542 = vrot.slane %v1870, 6
        %v2543 = vrot.slane %v1871, 6
        %v2544 = vsel %vm2450, %v2542, %v2543
        %v2545 = vrot.slane %v1872, 6
        %v2546 = vsel %vm2450, %v2543, %v2545
        %v2547 = vrot.slane %v1873, 6
        %v2548 = vsel %vm2450, %v2545, %v2547
        %v2549 = vrot.slane %v1874, 6
        %v2550 = vrot.slane %v1875, 6
        %v2551 = vsel %vm2450, %v2549, %v2550
        %v2552 = vrot.slane %v1876, 6
        %v2553 = vsel %vm2450, %v2550, %v2552
        %v2554 = vrot.slane %v1877, 6
        %v2555 = vsel %vm2450, %v2552, %v2554
        %v2601 = vadd.f32 %v2405, %v2453
        %v2602 = vadd.f32 %v2406, %v2455
        %v2603 = vadd.f32 %v2407, %v2457
        %v2604 = vadd.f32 %v2408, %v2460
        %v2605 = vadd.f32 %v2409, %v2462
        %v2606 = vadd.f32 %v2410, %v2464
        %v2607 = vadd.f32 %v2411, %v2467
        %v2608 = vadd.f32 %v2412, %v2469
        %v2609 = vadd.f32 %v2413, %v2471
        %v2610 = vadd.f32 %v2414, %v2474
        %v2611 = vadd.f32 %v2415, %v2476
        %v2612 = vadd.f32 %v2416, %v2478
        %v2613 = vadd.f32 %v2417, %v2481
        %v2614 = vadd.f32 %v2418, %v2483
        %v2615 = vadd.f32 %v2419, %v2485
        %v2616 = vadd.f32 %v2420, %v2488
        %v2617 = vadd.f32 %v2421, %v2490
        %v2618 = vadd.f32 %v2422, %v2492
        %v2619 = vadd.f32 %v2423, %v2495
        %v2620 = vadd.f32 %v2424, %v2497
        %v2621 = vadd.f32 %v2425, %v2499
        %v2622 = vadd.f32 %v2426, %v2502
        %v2623 = vadd.f32 %v2427, %v2504
        %v2624 = vadd.f32 %v2428, %v2506
        %v2625 = vadd.f32 %v2429, %v2509
        %v2626 = vadd.f32 %v2430, %v2511
        %v2627 = vadd.f32 %v2431, %v2513
        %v2628 = vadd.f32 %v2432, %v2516
        %v2629 = vadd.f32 %v2433, %v2518
        %v2630 = vadd.f32 %v2434, %v2520
        %v2631 = vadd.f32 %v2435, %v2523
        %v2632 = vadd.f32 %v2436, %v2525
        %v2633 = vadd.f32 %v2437, %v2527
        %v2634 = vadd.f32 %v2438, %v2530
        %v2635 = vadd.f32 %v2439, %v2532
        %v2636 = vadd.f32 %v2440, %v2534
        %v2637 = vadd.f32 %v2441, %v2537
        %v2638 = vadd.f32 %v2442, %v2539
        %v2639 = vadd.f32 %v2443, %v2541
        %v2640 = vadd.f32 %v2444, %v2544
        %v2641 = vadd.f32 %v2445, %v2546
        %v2642 = vadd.f32 %v2446, %v2548
        %v2643 = vadd.f32 %v2447, %v2551
        %v2644 = vadd.f32 %v2448, %v2553
        %v2645 = vadd.f32 %v2449, %v2555
        %vm2646 = vcmask 1040384
        %v2647 = vrot.slane %v1502, 7
        %v2648 = vrot.slane %v1503, 7
        %v2649 = vsel %vm2646, %v2647, %v2648
        %v2650 = vrot.slane %v1504, 7
        %v2651 = vsel %vm2646, %v2648, %v2650
        %v2652 = vrot.slane %v1505, 7
        %v2653 = vsel %vm2646, %v2650, %v2652
        %v2654 = vrot.slane %v1506, 7
        %v2655 = vrot.slane %v1507, 7
        %v2656 = vsel %vm2646, %v2654, %v2655
        %v2657 = vrot.slane %v1508, 7
        %v2658 = vsel %vm2646, %v2655, %v2657
        %v2659 = vrot.slane %v1509, 7
        %v2660 = vsel %vm2646, %v2657, %v2659
        %v2661 = vrot.slane %v1510, 7
        %v2662 = vrot.slane %v1511, 7
        %v2663 = vsel %vm2646, %v2661, %v2662
        %v2664 = vrot.slane %v1512, 7
        %v2665 = vsel %vm2646, %v2662, %v2664
        %v2666 = vrot.slane %v1513, 7
        %v2667 = vsel %vm2646, %v2664, %v2666
        %v2668 = vrot.slane %v1514, 7
        %v2669 = vrot.slane %v1515, 7
        %v2670 = vsel %vm2646, %v2668, %v2669
        %v2671 = vrot.slane %v1516, 7
        %v2672 = vsel %vm2646, %v2669, %v2671
        %v2673 = vrot.slane %v1517, 7
        %v2674 = vsel %vm2646, %v2671, %v2673
        %v2675 = vrot.slane %v1518, 7
        %v2676 = vrot.slane %v1519, 7
        %v2677 = vsel %vm2646, %v2675, %v2676
        %v2678 = vrot.slane %v1520, 7
        %v2679 = vsel %vm2646, %v2676, %v2678
        %v2680 = vrot.slane %v1521, 7
        %v2681 = vsel %vm2646, %v2678, %v2680
        %v2682 = vrot.slane %v1522, 7
        %v2683 = vrot.slane %v1523, 7
        %v2684 = vsel %vm2646, %v2682, %v2683
        %v2685 = vrot.slane %v1524, 7
        %v2686 = vsel %vm2646, %v2683, %v2685
        %v2687 = vrot.slane %v1525, 7
        %v2688 = vsel %vm2646, %v2685, %v2687
        %v2689 = vrot.slane %v1526, 7
        %v2690 = vrot.slane %v1527, 7
        %v2691 = vsel %vm2646, %v2689, %v2690
        %v2692 = vrot.slane %v1528, 7
        %v2693 = vsel %vm2646, %v2690, %v2692
        %v2694 = vrot.slane %v1529, 7
        %v2695 = vsel %vm2646, %v2692, %v2694
        %v2696 = vrot.slane %v1530, 7
        %v2697 = vrot.slane %v1531, 7
        %v2698 = vsel %vm2646, %v2696, %v2697
        %v2699 = vrot.slane %v1532, 7
        %v2700 = vsel %vm2646, %v2697, %v2699
        %v2701 = vrot.slane %v1533, 7
        %v2702 = vsel %vm2646, %v2699, %v2701
        %v2703 = vrot.slane %v1534, 7
        %v2704 = vrot.slane %v1535, 7
        %v2705 = vsel %vm2646, %v2703, %v2704
        %v2706 = vrot.slane %v1536, 7
        %v2707 = vsel %vm2646, %v2704, %v2706
        %v2708 = vrot.slane %v1537, 7
        %v2709 = vsel %vm2646, %v2706, %v2708
        %v2710 = vrot.slane %v1538, 7
        %v2711 = vrot.slane %v1539, 7
        %v2712 = vsel %vm2646, %v2710, %v2711
        %v2713 = vrot.slane %v1540, 7
        %v2714 = vsel %vm2646, %v2711, %v2713
        %v2715 = vrot.slane %v1541, 7
        %v2716 = vsel %vm2646, %v2713, %v2715
        %v2717 = vrot.slane %v1542, 7
        %v2718 = vrot.slane %v1543, 7
        %v2719 = vsel %vm2646, %v2717, %v2718
        %v2720 = vrot.slane %v1544, 7
        %v2721 = vsel %vm2646, %v2718, %v2720
        %v2722 = vrot.slane %v1545, 7
        %v2723 = vsel %vm2646, %v2720, %v2722
        %v2724 = vrot.slane %v1546, 7
        %v2725 = vrot.slane %v1547, 7
        %v2726 = vsel %vm2646, %v2724, %v2725
        %v2727 = vrot.slane %v1548, 7
        %v2728 = vsel %vm2646, %v2725, %v2727
        %v2729 = vrot.slane %v1549, 7
        %v2730 = vsel %vm2646, %v2727, %v2729
        %v2731 = vrot.slane %v1550, 7
        %v2732 = vrot.slane %v1551, 7
        %v2733 = vsel %vm2646, %v2731, %v2732
        %v2734 = vrot.slane %v1552, 7
        %v2735 = vsel %vm2646, %v2732, %v2734
        %v2736 = vrot.slane %v1553, 7
        %v2737 = vsel %vm2646, %v2734, %v2736
        %v2738 = vrot.slane %v1554, 7
        %v2739 = vrot.slane %v1555, 7
        %v2740 = vsel %vm2646, %v2738, %v2739
        %v2741 = vrot.slane %v1556, 7
        %v2742 = vsel %vm2646, %v2739, %v2741
        %v2743 = vrot.slane %v1557, 7
        %v2744 = vsel %vm2646, %v2741, %v2743
        %v2745 = vrot.slane %v1558, 7
        %v2746 = vrot.slane %v1559, 7
        %v2747 = vsel %vm2646, %v2745, %v2746
        %v2748 = vrot.slane %v1560, 7
        %v2749 = vsel %vm2646, %v2746, %v2748
        %v2750 = vrot.slane %v1561, 7
        %v2751 = vsel %vm2646, %v2748, %v2750
        %v2797 = vadd.f32 %v2601, %v2649
        %v2798 = vadd.f32 %v2602, %v2651
        %v2799 = vadd.f32 %v2603, %v2653
        %v2800 = vadd.f32 %v2604, %v2656
        %v2801 = vadd.f32 %v2605, %v2658
        %v2802 = vadd.f32 %v2606, %v2660
        %v2803 = vadd.f32 %v2607, %v2663
        %v2804 = vadd.f32 %v2608, %v2665
        %v2805 = vadd.f32 %v2609, %v2667
        %v2806 = vadd.f32 %v2610, %v2670
        %v2807 = vadd.f32 %v2611, %v2672
        %v2808 = vadd.f32 %v2612, %v2674
        %v2809 = vadd.f32 %v2613, %v2677
        %v2810 = vadd.f32 %v2614, %v2679
        %v2811 = vadd.f32 %v2615, %v2681
        %v2812 = vadd.f32 %v2616, %v2684
        %v2813 = vadd.f32 %v2617, %v2686
        %v2814 = vadd.f32 %v2618, %v2688
        %v2815 = vadd.f32 %v2619, %v2691
        %v2816 = vadd.f32 %v2620, %v2693
        %v2817 = vadd.f32 %v2621, %v2695
        %v2818 = vadd.f32 %v2622, %v2698
        %v2819 = vadd.f32 %v2623, %v2700
        %v2820 = vadd.f32 %v2624, %v2702
        %v2821 = vadd.f32 %v2625, %v2705
        %v2822 = vadd.f32 %v2626, %v2707
        %v2823 = vadd.f32 %v2627, %v2709
        %v2824 = vadd.f32 %v2628, %v2712
        %v2825 = vadd.f32 %v2629, %v2714
        %v2826 = vadd.f32 %v2630, %v2716
        %v2827 = vadd.f32 %v2631, %v2719
        %v2828 = vadd.f32 %v2632, %v2721
        %v2829 = vadd.f32 %v2633, %v2723
        %v2830 = vadd.f32 %v2634, %v2726
        %v2831 = vadd.f32 %v2635, %v2728
        %v2832 = vadd.f32 %v2636, %v2730
        %v2833 = vadd.f32 %v2637, %v2733
        %v2834 = vadd.f32 %v2638, %v2735
        %v2835 = vadd.f32 %v2639, %v2737
        %v2836 = vadd.f32 %v2640, %v2740
        %v2837 = vadd.f32 %v2641, %v2742
        %v2838 = vadd.f32 %v2642, %v2744
        %v2839 = vadd.f32 %v2643, %v2747
        %v2840 = vadd.f32 %v2644, %v2749
        %v2841 = vadd.f32 %v2645, %v2751
        %v2842 = vmul.f32 %v662, 0.036000773
        %v2843 = vmul.f32 %v682, 0.036000773
        %v2844 = vmul.f32 %v702, 0.036000773
        %v2845 = vmul.f32 %v722, 0.036000773
        %v2846 = vmul.f32 %v742, 0.036000773
        %v2847 = vmul.f32 %v762, 0.036000773
        %v2848 = vmul.f32 %v782, 0.036000773
        %v2849 = vmul.f32 %v802, 0.036000773
        %v2850 = vmul.f32 %v822, 0.036000773
        %v2851 = vmul.f32 %v842, 0.036000773
        %v2852 = vmul.f32 %v862, 0.036000773
        %v2853 = vmul.f32 %v882, 0.036000773
        %v2854 = vmul.f32 %v902, 0.036000773
        %v2855 = vmul.f32 %v922, 0.036000773
        %v2856 = vmul.f32 %v942, 0.036000773
        %v2857 = vadd.f32 %v2797, %v1247
        %v2858 = vadd.f32 %v2798, %v1248
        %v2859 = vadd.f32 %v2799, %v2842
        %v2860 = vadd.f32 %v2800, %v1250
        %v2861 = vadd.f32 %v2801, %v1251
        %v2862 = vadd.f32 %v2802, %v2843
        %v2863 = vadd.f32 %v2803, %v1253
        %v2864 = vadd.f32 %v2804, %v1254
        %v2865 = vadd.f32 %v2805, %v2844
        %v2866 = vadd.f32 %v2806, %v1256
        %v2867 = vadd.f32 %v2807, %v1257
        %v2868 = vadd.f32 %v2808, %v2845
        %v2869 = vadd.f32 %v2809, %v1259
        %v2870 = vadd.f32 %v2810, %v1260
        %v2871 = vadd.f32 %v2811, %v2846
        %v2872 = vadd.f32 %v2812, %v1262
        %v2873 = vadd.f32 %v2813, %v1263
        %v2874 = vadd.f32 %v2814, %v2847
        %v2875 = vadd.f32 %v2815, %v1265
        %v2876 = vadd.f32 %v2816, %v1266
        %v2877 = vadd.f32 %v2817, %v2848
        %v2878 = vadd.f32 %v2818, %v1268
        %v2879 = vadd.f32 %v2819, %v1269
        %v2880 = vadd.f32 %v2820, %v2849
        %v2881 = vadd.f32 %v2821, %v1271
        %v2882 = vadd.f32 %v2822, %v1272
        %v2883 = vadd.f32 %v2823, %v2850
        %v2884 = vadd.f32 %v2824, %v1274
        %v2885 = vadd.f32 %v2825, %v1275
        %v2886 = vadd.f32 %v2826, %v2851
        %v2887 = vadd.f32 %v2827, %v1277
        %v2888 = vadd.f32 %v2828, %v1278
        %v2889 = vadd.f32 %v2829, %v2852
        %v2890 = vadd.f32 %v2830, %v1280
        %v2891 = vadd.f32 %v2831, %v1281
        %v2892 = vadd.f32 %v2832, %v2853
        %v2893 = vadd.f32 %v2833, %v1283
        %v2894 = vadd.f32 %v2834, %v1284
        %v2895 = vadd.f32 %v2835, %v2854
        %v2896 = vadd.f32 %v2836, %v1286
        %v2897 = vadd.f32 %v2837, %v1287
        %v2898 = vadd.f32 %v2838, %v2855
        %v2899 = vadd.f32 %v2839, %v1289
        %v2900 = vadd.f32 %v2840, %v1290
        %v2901 = vadd.f32 %v2841, %v2856
        %v2902 = vmul.f32 %v662, 0.007598758
        %v2903 = vmul.f32 %v682, 0.007598758
        %v2904 = vmul.f32 %v702, 0.007598758
        %v2905 = vmul.f32 %v722, 0.007598758
        %v2906 = vmul.f32 %v742, 0.007598758
        %v2907 = vmul.f32 %v762, 0.007598758
        %v2908 = vmul.f32 %v782, 0.007598758
        %v2909 = vmul.f32 %v802, 0.007598758
        %v2910 = vmul.f32 %v822, 0.007598758
        %v2911 = vmul.f32 %v842, 0.007598758
        %v2912 = vmul.f32 %v862, 0.007598758
        %v2913 = vmul.f32 %v882, 0.007598758
        %v2914 = vmul.f32 %v902, 0.007598758
        %v2915 = vmul.f32 %v922, 0.007598758
        %v2916 = vmul.f32 %v942, 0.007598758
        %v2932 = vrot.slane %v2902, 1
        %v2933 = vsel %vm1080, %v1084, %v2932
        %v2934 = vrot.slane %v2903, 1
        %v2935 = vsel %vm1080, %v1089, %v2934
        %v2936 = vrot.slane %v2904, 1
        %v2937 = vsel %vm1080, %v1094, %v2936
        %v2938 = vrot.slane %v2905, 1
        %v2939 = vsel %vm1080, %v1099, %v2938
        %v2940 = vrot.slane %v2906, 1
        %v2941 = vsel %vm1080, %v1104, %v2940
        %v2942 = vrot.slane %v2907, 1
        %v2943 = vsel %vm1080, %v1109, %v2942
        %v2944 = vrot.slane %v2908, 1
        %v2945 = vsel %vm1080, %v1114, %v2944
        %v2946 = vrot.slane %v2909, 1
        %v2947 = vsel %vm1080, %v1119, %v2946
        %v2948 = vrot.slane %v2910, 1
        %v2949 = vsel %vm1080, %v1124, %v2948
        %v2950 = vrot.slane %v2911, 1
        %v2951 = vsel %vm1080, %v1129, %v2950
        %v2952 = vrot.slane %v2912, 1
        %v2953 = vsel %vm1080, %v1134, %v2952
        %v2954 = vrot.slane %v2913, 1
        %v2955 = vsel %vm1080, %v1139, %v2954
        %v2956 = vrot.slane %v2914, 1
        %v2957 = vsel %vm1080, %v1144, %v2956
        %v2958 = vrot.slane %v2915, 1
        %v2959 = vsel %vm1080, %v1149, %v2958
        %v2960 = vrot.slane %v2916, 1
        %v2961 = vsel %vm1080, %v1154, %v2960
        %v2992 = vadd.f32 %v2857, %v1085
        %v2993 = vadd.f32 %v2858, %v2933
        %v2994 = vadd.f32 %v2859, %v2932
        %v2995 = vadd.f32 %v2860, %v1090
        %v2996 = vadd.f32 %v2861, %v2935
        %v2997 = vadd.f32 %v2862, %v2934
        %v2998 = vadd.f32 %v2863, %v1095
        %v2999 = vadd.f32 %v2864, %v2937
        %v3000 = vadd.f32 %v2865, %v2936
        %v3001 = vadd.f32 %v2866, %v1100
        %v3002 = vadd.f32 %v2867, %v2939
        %v3003 = vadd.f32 %v2868, %v2938
        %v3004 = vadd.f32 %v2869, %v1105
        %v3005 = vadd.f32 %v2870, %v2941
        %v3006 = vadd.f32 %v2871, %v2940
        %v3007 = vadd.f32 %v2872, %v1110
        %v3008 = vadd.f32 %v2873, %v2943
        %v3009 = vadd.f32 %v2874, %v2942
        %v3010 = vadd.f32 %v2875, %v1115
        %v3011 = vadd.f32 %v2876, %v2945
        %v3012 = vadd.f32 %v2877, %v2944
        %v3013 = vadd.f32 %v2878, %v1120
        %v3014 = vadd.f32 %v2879, %v2947
        %v3015 = vadd.f32 %v2880, %v2946
        %v3016 = vadd.f32 %v2881, %v1125
        %v3017 = vadd.f32 %v2882, %v2949
        %v3018 = vadd.f32 %v2883, %v2948
        %v3019 = vadd.f32 %v2884, %v1130
        %v3020 = vadd.f32 %v2885, %v2951
        %v3021 = vadd.f32 %v2886, %v2950
        %v3022 = vadd.f32 %v2887, %v1135
        %v3023 = vadd.f32 %v2888, %v2953
        %v3024 = vadd.f32 %v2889, %v2952
        %v3025 = vadd.f32 %v2890, %v1140
        %v3026 = vadd.f32 %v2891, %v2955
        %v3027 = vadd.f32 %v2892, %v2954
        %v3028 = vadd.f32 %v2893, %v1145
        %v3029 = vadd.f32 %v2894, %v2957
        %v3030 = vadd.f32 %v2895, %v2956
        %v3031 = vadd.f32 %v2896, %v1150
        %v3032 = vadd.f32 %v2897, %v2959
        %v3033 = vadd.f32 %v2898, %v2958
        %v3034 = vadd.f32 %v2899, %v1155
        %v3035 = vadd.f32 %v2900, %v2961
        %v3036 = vadd.f32 %v2901, %v2960
        %v3037 = vmul.f32 %v662, 0.0010283801
        %v3038 = vmul.f32 %v682, 0.0010283801
        %v3039 = vmul.f32 %v702, 0.0010283801
        %v3040 = vmul.f32 %v722, 0.0010283801
        %v3041 = vmul.f32 %v742, 0.0010283801
        %v3042 = vmul.f32 %v762, 0.0010283801
        %v3043 = vmul.f32 %v782, 0.0010283801
        %v3044 = vmul.f32 %v802, 0.0010283801
        %v3045 = vmul.f32 %v822, 0.0010283801
        %v3046 = vmul.f32 %v842, 0.0010283801
        %v3047 = vmul.f32 %v862, 0.0010283801
        %v3048 = vmul.f32 %v882, 0.0010283801
        %v3049 = vmul.f32 %v902, 0.0010283801
        %v3050 = vmul.f32 %v922, 0.0010283801
        %v3051 = vmul.f32 %v942, 0.0010283801
        %v3097 = vrot.slane %v946, 2
        %v3098 = vrot.slane %v947, 2
        %v3099 = vsel %vm1336, %v3097, %v3098
        %v3100 = vrot.slane %v3037, 2
        %v3101 = vsel %vm1336, %v3098, %v3100
        %v3102 = vrot.slane %v949, 2
        %v3103 = vrot.slane %v950, 2
        %v3104 = vsel %vm1336, %v3102, %v3103
        %v3105 = vrot.slane %v3038, 2
        %v3106 = vsel %vm1336, %v3103, %v3105
        %v3107 = vrot.slane %v952, 2
        %v3108 = vrot.slane %v953, 2
        %v3109 = vsel %vm1336, %v3107, %v3108
        %v3110 = vrot.slane %v3039, 2
        %v3111 = vsel %vm1336, %v3108, %v3110
        %v3112 = vrot.slane %v955, 2
        %v3113 = vrot.slane %v956, 2
        %v3114 = vsel %vm1336, %v3112, %v3113
        %v3115 = vrot.slane %v3040, 2
        %v3116 = vsel %vm1336, %v3113, %v3115
        %v3117 = vrot.slane %v958, 2
        %v3118 = vrot.slane %v959, 2
        %v3119 = vsel %vm1336, %v3117, %v3118
        %v3120 = vrot.slane %v3041, 2
        %v3121 = vsel %vm1336, %v3118, %v3120
        %v3122 = vrot.slane %v961, 2
        %v3123 = vrot.slane %v962, 2
        %v3124 = vsel %vm1336, %v3122, %v3123
        %v3125 = vrot.slane %v3042, 2
        %v3126 = vsel %vm1336, %v3123, %v3125
        %v3127 = vrot.slane %v964, 2
        %v3128 = vrot.slane %v965, 2
        %v3129 = vsel %vm1336, %v3127, %v3128
        %v3130 = vrot.slane %v3043, 2
        %v3131 = vsel %vm1336, %v3128, %v3130
        %v3132 = vrot.slane %v967, 2
        %v3133 = vrot.slane %v968, 2
        %v3134 = vsel %vm1336, %v3132, %v3133
        %v3135 = vrot.slane %v3044, 2
        %v3136 = vsel %vm1336, %v3133, %v3135
        %v3137 = vrot.slane %v970, 2
        %v3138 = vrot.slane %v971, 2
        %v3139 = vsel %vm1336, %v3137, %v3138
        %v3140 = vrot.slane %v3045, 2
        %v3141 = vsel %vm1336, %v3138, %v3140
        %v3142 = vrot.slane %v973, 2
        %v3143 = vrot.slane %v974, 2
        %v3144 = vsel %vm1336, %v3142, %v3143
        %v3145 = vrot.slane %v3046, 2
        %v3146 = vsel %vm1336, %v3143, %v3145
        %v3147 = vrot.slane %v976, 2
        %v3148 = vrot.slane %v977, 2
        %v3149 = vsel %vm1336, %v3147, %v3148
        %v3150 = vrot.slane %v3047, 2
        %v3151 = vsel %vm1336, %v3148, %v3150
        %v3152 = vrot.slane %v979, 2
        %v3153 = vrot.slane %v980, 2
        %v3154 = vsel %vm1336, %v3152, %v3153
        %v3155 = vrot.slane %v3048, 2
        %v3156 = vsel %vm1336, %v3153, %v3155
        %v3157 = vrot.slane %v982, 2
        %v3158 = vrot.slane %v983, 2
        %v3159 = vsel %vm1336, %v3157, %v3158
        %v3160 = vrot.slane %v3049, 2
        %v3161 = vsel %vm1336, %v3158, %v3160
        %v3162 = vrot.slane %v985, 2
        %v3163 = vrot.slane %v986, 2
        %v3164 = vsel %vm1336, %v3162, %v3163
        %v3165 = vrot.slane %v3050, 2
        %v3166 = vsel %vm1336, %v3163, %v3165
        %v3167 = vrot.slane %v988, 2
        %v3168 = vrot.slane %v989, 2
        %v3169 = vsel %vm1336, %v3167, %v3168
        %v3170 = vrot.slane %v3051, 2
        %v3171 = vsel %vm1336, %v3168, %v3170
        %v3217 = vadd.f32 %v2992, %v3099
        %v3218 = vadd.f32 %v2993, %v3101
        %v3219 = vadd.f32 %v2994, %v3100
        %v3220 = vadd.f32 %v2995, %v3104
        %v3221 = vadd.f32 %v2996, %v3106
        %v3222 = vadd.f32 %v2997, %v3105
        %v3223 = vadd.f32 %v2998, %v3109
        %v3224 = vadd.f32 %v2999, %v3111
        %v3225 = vadd.f32 %v3000, %v3110
        %v3226 = vadd.f32 %v3001, %v3114
        %v3227 = vadd.f32 %v3002, %v3116
        %v3228 = vadd.f32 %v3003, %v3115
        %v3229 = vadd.f32 %v3004, %v3119
        %v3230 = vadd.f32 %v3005, %v3121
        %v3231 = vadd.f32 %v3006, %v3120
        %v3232 = vadd.f32 %v3007, %v3124
        %v3233 = vadd.f32 %v3008, %v3126
        %v3234 = vadd.f32 %v3009, %v3125
        %v3235 = vadd.f32 %v3010, %v3129
        %v3236 = vadd.f32 %v3011, %v3131
        %v3237 = vadd.f32 %v3012, %v3130
        %v3238 = vadd.f32 %v3013, %v3134
        %v3239 = vadd.f32 %v3014, %v3136
        %v3240 = vadd.f32 %v3015, %v3135
        %v3241 = vadd.f32 %v3016, %v3139
        %v3242 = vadd.f32 %v3017, %v3141
        %v3243 = vadd.f32 %v3018, %v3140
        %v3244 = vadd.f32 %v3019, %v3144
        %v3245 = vadd.f32 %v3020, %v3146
        %v3246 = vadd.f32 %v3021, %v3145
        %v3247 = vadd.f32 %v3022, %v3149
        %v3248 = vadd.f32 %v3023, %v3151
        %v3249 = vadd.f32 %v3024, %v3150
        %v3250 = vadd.f32 %v3025, %v3154
        %v3251 = vadd.f32 %v3026, %v3156
        %v3252 = vadd.f32 %v3027, %v3155
        %v3253 = vadd.f32 %v3028, %v3159
        %v3254 = vadd.f32 %v3029, %v3161
        %v3255 = vadd.f32 %v3030, %v3160
        %v3256 = vadd.f32 %v3031, %v3164
        %v3257 = vadd.f32 %v3032, %v3166
        %v3258 = vadd.f32 %v3033, %v3165
        %v3259 = vadd.f32 %v3034, %v3169
        %v3260 = vadd.f32 %v3035, %v3171
        %v3261 = vadd.f32 %v3036, %v3170
        %v3262 = vmul.f32 %v3217, %v3217
        %v3263 = vmul.f32 %v3218, %v3218
        %v3264 = vmul.f32 %v3219, %v3219
        %v3265 = vmul.f32 %v3220, %v3220
        %v3266 = vmul.f32 %v3221, %v3221
        %v3267 = vmul.f32 %v3222, %v3222
        %v3268 = vmul.f32 %v3223, %v3223
        %v3269 = vmul.f32 %v3224, %v3224
        %v3270 = vmul.f32 %v3225, %v3225
        %v3271 = vmul.f32 %v3226, %v3226
        %v3272 = vmul.f32 %v3227, %v3227
        %v3273 = vmul.f32 %v3228, %v3228
        %v3274 = vmul.f32 %v3229, %v3229
        %v3275 = vmul.f32 %v3230, %v3230
        %v3276 = vmul.f32 %v3231, %v3231
        %v3277 = vmul.f32 %v3232, %v3232
        %v3278 = vmul.f32 %v3233, %v3233
        %v3279 = vmul.f32 %v3234, %v3234
        %v3280 = vmul.f32 %v3217, %v3226
        %v3281 = vmul.f32 %v3218, %v3227
        %v3282 = vmul.f32 %v3219, %v3228
        %v3283 = vmul.f32 %v3220, %v3229
        %v3284 = vmul.f32 %v3221, %v3230
        %v3285 = vmul.f32 %v3222, %v3231
        %v3286 = vmul.f32 %v3223, %v3232
        %v3287 = vmul.f32 %v3224, %v3233
        %v3288 = vmul.f32 %v3225, %v3234
        %v3289 = vsub.f32 %v3235, %v3262
        %v3290 = vsub.f32 %v3236, %v3263
        %v3291 = vsub.f32 %v3237, %v3264
        %v3292 = vsub.f32 %v3238, %v3265
        %v3293 = vsub.f32 %v3239, %v3266
        %v3294 = vsub.f32 %v3240, %v3267
        %v3295 = vsub.f32 %v3241, %v3268
        %v3296 = vsub.f32 %v3242, %v3269
        %v3297 = vsub.f32 %v3243, %v3270
        %v3298 = vsub.f32 %v3244, %v3271
        %v3299 = vsub.f32 %v3245, %v3272
        %v3300 = vsub.f32 %v3246, %v3273
        %v3301 = vsub.f32 %v3247, %v3274
        %v3302 = vsub.f32 %v3248, %v3275
        %v3303 = vsub.f32 %v3249, %v3276
        %v3304 = vsub.f32 %v3250, %v3277
        %v3305 = vsub.f32 %v3251, %v3278
        %v3306 = vsub.f32 %v3252, %v3279
        %v3307 = vsub.f32 %v3253, %v3280
        %v3308 = vsub.f32 %v3254, %v3281
        %v3309 = vsub.f32 %v3255, %v3282
        %v3310 = vsub.f32 %v3256, %v3283
        %v3311 = vsub.f32 %v3257, %v3284
        %v3312 = vsub.f32 %v3258, %v3285
        %v3313 = vsub.f32 %v3259, %v3286
        %v3314 = vsub.f32 %v3260, %v3287
        %v3315 = vsub.f32 %v3261, %v3288
        %v3316 = vmul.f32 %v3280, 2.0
        %v3317 = vmul.f32 %v3281, 2.0
        %v3318 = vmul.f32 %v3282, 2.0
        %v3319 = vmul.f32 %v3283, 2.0
        %v3320 = vmul.f32 %v3284, 2.0
        %v3321 = vmul.f32 %v3285, 2.0
        %v3322 = vmul.f32 %v3286, 2.0
        %v3323 = vmul.f32 %v3287, 2.0
        %v3324 = vmul.f32 %v3288, 2.0
        %v3325 = vadd.f32 %v3316, 0.0001
        %v3326 = vadd.f32 %v3317, 0.0001
        %v3327 = vadd.f32 %v3318, 0.0001
        %v3328 = vadd.f32 %v3319, 0.0001
        %v3329 = vadd.f32 %v3320, 0.0001
        %v3330 = vadd.f32 %v3321, 0.0001
        %v3331 = vadd.f32 %v3322, 0.0001
        %v3332 = vadd.f32 %v3323, 0.0001
        %v3333 = vadd.f32 %v3324, 0.0001
        %v3334 = vmul.f32 %v3307, 2.0
        %v3335 = vmul.f32 %v3308, 2.0
        %v3336 = vmul.f32 %v3309, 2.0
        %v3337 = vmul.f32 %v3310, 2.0
        %v3338 = vmul.f32 %v3311, 2.0
        %v3339 = vmul.f32 %v3312, 2.0
        %v3340 = vmul.f32 %v3313, 2.0
        %v3341 = vmul.f32 %v3314, 2.0
        %v3342 = vmul.f32 %v3315, 2.0
        %v3343 = vadd.f32 %v3334, 0.0009
        %v3344 = vadd.f32 %v3335, 0.0009
        %v3345 = vadd.f32 %v3336, 0.0009
        %v3346 = vadd.f32 %v3337, 0.0009
        %v3347 = vadd.f32 %v3338, 0.0009
        %v3348 = vadd.f32 %v3339, 0.0009
        %v3349 = vadd.f32 %v3340, 0.0009
        %v3350 = vadd.f32 %v3341, 0.0009
        %v3351 = vadd.f32 %v3342, 0.0009
        %v3352 = vmul.f32 %v3325, %v3343
        %v3353 = vmul.f32 %v3326, %v3344
        %v3354 = vmul.f32 %v3327, %v3345
        %v3355 = vmul.f32 %v3328, %v3346
        %v3356 = vmul.f32 %v3329, %v3347
        %v3357 = vmul.f32 %v3330, %v3348
        %v3358 = vmul.f32 %v3331, %v3349
        %v3359 = vmul.f32 %v3332, %v3350
        %v3360 = vmul.f32 %v3333, %v3351
        %v3361 = vadd.f32 %v3262, %v3271
        %v3362 = vadd.f32 %v3263, %v3272
        %v3363 = vadd.f32 %v3264, %v3273
        %v3364 = vadd.f32 %v3265, %v3274
        %v3365 = vadd.f32 %v3266, %v3275
        %v3366 = vadd.f32 %v3267, %v3276
        %v3367 = vadd.f32 %v3268, %v3277
        %v3368 = vadd.f32 %v3269, %v3278
        %v3369 = vadd.f32 %v3270, %v3279
        %v3370 = vadd.f32 %v3361, 0.0001
        %v3371 = vadd.f32 %v3362, 0.0001
        %v3372 = vadd.f32 %v3363, 0.0001
        %v3373 = vadd.f32 %v3364, 0.0001
        %v3374 = vadd.f32 %v3365, 0.0001
        %v3375 = vadd.f32 %v3366, 0.0001
        %v3376 = vadd.f32 %v3367, 0.0001
        %v3377 = vadd.f32 %v3368, 0.0001
        %v3378 = vadd.f32 %v3369, 0.0001
        %v3379 = vadd.f32 %v3289, %v3298
        %v3380 = vadd.f32 %v3290, %v3299
        %v3381 = vadd.f32 %v3291, %v3300
        %v3382 = vadd.f32 %v3292, %v3301
        %v3383 = vadd.f32 %v3293, %v3302
        %v3384 = vadd.f32 %v3294, %v3303
        %v3385 = vadd.f32 %v3295, %v3304
        %v3386 = vadd.f32 %v3296, %v3305
        %v3387 = vadd.f32 %v3297, %v3306
        %v3388 = vadd.f32 %v3379, 0.0009
        %v3389 = vadd.f32 %v3380, 0.0009
        %v3390 = vadd.f32 %v3381, 0.0009
        %v3391 = vadd.f32 %v3382, 0.0009
        %v3392 = vadd.f32 %v3383, 0.0009
        %v3393 = vadd.f32 %v3384, 0.0009
        %v3394 = vadd.f32 %v3385, 0.0009
        %v3395 = vadd.f32 %v3386, 0.0009
        %v3396 = vadd.f32 %v3387, 0.0009
        %v3397 = vmul.f32 %v3370, %v3388
        %v3398 = vmul.f32 %v3371, %v3389
        %v3399 = vmul.f32 %v3372, %v3390
        %v3400 = vmul.f32 %v3373, %v3391
        %v3401 = vmul.f32 %v3374, %v3392
        %v3402 = vmul.f32 %v3375, %v3393
        %v3403 = vmul.f32 %v3376, %v3394
        %v3404 = vmul.f32 %v3377, %v3395
        %v3405 = vmul.f32 %v3378, %v3396
        %v3406 = vrcp.pop %v3397
        %v3407 = vrcp.pop %v3398
        %v3408 = vrcp.pop %v3399
        %v3409 = vrcp.pop %v3400
        %v3410 = vrcp.pop %v3401
        %v3411 = vrcp.pop %v3402
        %v3412 = vrcp.pop %v3403
        %v3413 = vrcp.pop %v3404
        %v3414 = vrcp.pop %v3405
        %v3415 = vmul.f32 %v3352, %v3406
        %v3416 = vmul.f32 %v3353, %v3407
        %v3417 = vmul.f32 %v3354, %v3408
        %v3418 = vmul.f32 %v3355, %v3409
        %v3419 = vmul.f32 %v3356, %v3410
        %v3420 = vmul.f32 %v3357, %v3411
        %v3421 = vmul.f32 %v3358, %v3412
        %v3422 = vmul.f32 %v3359, %v3413
        %v3423 = vmul.f32 %v3360, %v3414
        %v3424 = vlaneseq
        %v3425 = vand.u32 %v3424, 127
        %vm3426 = vcmp.lt.s32.totalorder %v3425, 22
        %v3427 = vsel %vm3426, %v3415, 0.0
        %v3428 = vsel %vm3426, %v3416, 0.0
        %v3429 = vsel %vm3426, %v3417, 0.0
        %v3430 = vsel %vm3426, %v3418, 0.0
        %v3431 = vsel %vm3426, %v3419, 0.0
        %v3432 = vsel %vm3426, %v3420, 0.0
        %v3433 = vsel %vm3426, %v3421, 0.0
        %v3434 = vsel %vm3426, %v3422, 0.0
        %v3435 = vsel %vm3426, %v3423, 0.0
        %v3436 = vadd.f32 %v3427, %v3428
        %v3437 = vsel %vm1336, %v3429, 0.0
        %v3438 = vadd.f32 %v3436, %v3437
        %v3439 = vadd.f32 %v3438, %v3430
        %v3440 = vadd.f32 %v3439, %v3431
        %v3441 = vsel %vm1336, %v3432, 0.0
        %v3442 = vadd.f32 %v3440, %v3441
        %v3443 = vadd.f32 %v3442, %v3433
        %v3444 = vadd.f32 %v3443, %v3434
        %v3445 = vsel %vm1336, %v3435, 0.0
        %v3446 = vadd.f32 %v3444, %v3445
        %3447 = vadd.xlane.f32.xlu0 %v3446
        %v3448 = vpop.xlane.xlu0 %3447
        %v3449 = vrot.slane %v3448, 4
        %v3450 = vadd.f32 %v3448, %v3449
        %v3451 = vrot.slane %v3450, 2
        %v3452 = vadd.f32 %v3450, %v3451
        %v3453 = vrot.slane %v3452, 1
        %v3454 = vadd.f32 %v3452, %v3453
        %s3455 = vtos %v3454
        %v3456 = vlaneseq
        %v3457 = vshrl.u32 %v3456, 7
        %vm3458 = vcmp.eq.s32.totalorder %v3457, 0
        %vm3459 = vcmp.eq.s32.totalorder %v3457, 1
        %vm3460 = vcmp.eq.s32.totalorder %v3457, 2
        %v3461 = vstv %s3455
        %v3462 = vsel %vm3460, %v3461, 0.0
        %v3463 = vstv %s359
        %v3464 = vsel %vm3459, %v3463, %v3462
        %v3465 = vstv %s315
        %v3466 = vsel %vm3458, %v3465, %v3464
        %3467 = vst [vmem:[%s242] sm:$0xff] %v3466
        %s3468 = sand.u32 %s104, 1
        %s3469 = scalar_lea.sflag [#allocation4], %s3468
        %s3470 = sand.u32 %s104, 1
        %s3471 = smul.addr %s3470, 8
        %s3472 = scalar_lea.vmem [#allocation8], %s3471
        // Predicated region
        $region45: #{tpu_custom_call.1} parent=31 // pred_check
          %p3473 = pneg %p114
        $region46: #{tpu_custom_call.1} parent=31 // pred_check_branch
          %3475 = sbr.rel (%p3473) target = $region48
        $region47: #{tpu_custom_call.1} parent=31 // pred_region
          %s3477 = ssub.s32 128, 128
          %3478 = vsyncadd %s3469, %s3477
          %s3479 = smul.addr %s23, 128
          %s3480 = scalar_lea.hbm %s3, %s3479
          %s3482 = sshll.u32 %s3472, 4
          %s3483 = int_to_ptr.vmem [resolvable:$true] %s3482
          %3485 = dma.vmem_to_hbm [thread:$0]  %s3483, 128, %s3480, %s3469
        $region48: #{tpu_custom_call.1} parent=31 // pred_fallthru
          _
      $region32: #{tpu_custom_call.1} parent=5 // pred_fallthru
        _
      %p3486 = scmp.le.s32.totalorder 2, %s18
      // Predicated region
      $region49: #{tpu_custom_call.1} parent=5 // pred_check
        %p3487 = pneg %p3486
      $region50: #{tpu_custom_call.1} parent=5 // pred_check_branch
        %3489 = sbr.rel (%p3487) target = $region52
      $region51: #{tpu_custom_call.1} parent=5 // pred_region
        %s3490 = ssub.s32 %s18, 2
        // Predicated region
        $region53: #{tpu_custom_call.1} parent=51 // pred_check
          %p3491 = pneg %p120
        $region54: #{tpu_custom_call.1} parent=51 // pred_check_branch
          %3493 = sbr.rel (%p3491) target = $region56
        $region55: #{tpu_custom_call.1} parent=51 // pred_region
          %s3494 = sand.u32 %s105, 1
          %s3495 = scalar_lea.sflag [#allocation4], %s3494
          %s3496 = sand.u32 %s105, 1
          %s3497 = smul.addr %s3496, 8
          %s3498 = scalar_lea.vmem [#allocation8], %s3497
          %3499 = dma.done %s3495, 128
        $region56: #{tpu_custom_call.1} parent=51 // pred_fallthru
          _
      $region52: #{tpu_custom_call.1} parent=5 // pred_fallthru
        _
    $region6: #{tpu_custom_call.1} parent=1 // loop_footer
      %s22 = sadd.s32 1, %s18
    $region7: #{tpu_custom_call.1} parent=1 // loop_footer_branch
      %17 = sbr.rel target = $region3
    $region8: #{tpu_custom_call.1} parent=1 // loop_exit
      _
    %3500 = vsyncpa [#allocation3], 1
    %s3501 = scalar_lea.sflag [#allocation3], 1
    %3502 = vsyncpa %s3501, 1
    %3503 = vsyncpa [#allocation6], 1
    %s3504 = scalar_lea.sflag [#allocation6], 1
    %3505 = vsyncpa %s3504, 1
    %3506 = vsyncpa [#allocation4], 1
    %s3507 = scalar_lea.sflag [#allocation4], 1
    %3508 = vsyncpa %s3507, 1

</llo_original>
